<compile_context>
chip_gen: v7x
topology: tpu7x:2x2x1
jax: 0.10.0
libtpu: 0.0.40
codegen_flags: <defaults>
</compile_context>

<pallas_src>
import math
import functools

import jax
import jax.numpy as jnp
from jax.experimental import pallas as pl
from jax.experimental.pallas import tpu as pltpu

_SQRT_PI = math.sqrt(math.pi)
_TWO_OVER_SQRT_PI = 2.0 / math.sqrt(math.pi)
_ERF_CUBIC = 0.1009113059
_C_EPS = 1e-12
_LANES = 128


def _erf(x):
    # exp-free erf approximation: erf(x) ~= tanh(2/sqrt(pi)*x + k*x^3),
    # |abs err| < ~4e-4.  One EUP op per call (tanh).
    # NOTE(accuracy): for pairs with very small relative velocity the closed
    # form multiplies the erf difference by ~1/sqrt(c); the demo validates
    # against an exact-erf reference.  Swap in an A&S / erfc-based form here if
    # tighter accuracy is required (costs ~2 extra EUP + ~20 VALU per element).
    return jnp.tanh(x * (_TWO_OVER_SQRT_PI + _ERF_CUBIC * (x * x)))


def _nll_kernel(z_ref, v_ref, zT_ref, vT_ref, ev_ref, scal_ref, out_ref,
                *, block_m, block_n, n_nodes):
    r = pl.program_id(0)
    c = pl.program_id(1)

    beta = scal_ref[0]
    t0 = scal_ref[1]
    tn = scal_ref[2]

    # ---------------------------------------------------------------- c == 0
    # Fresh lane-dense accumulator for this row block, seeded with the negated
    # event-log-intensity sum of this row block's event chunk.  Events are
    # sharded across the r axis, so only O(M/R) event data is VMEM-resident and
    # the event work is balanced across cores.
    @pl.when(c == 0)
    def _():
        t = ev_ref[5]                                   # times     (chunk,128)
        px = ev_ref[0] + ev_ref[2] * t                  # dzx + dvx*t
        py = ev_ref[1] + ev_ref[3] * t                  # dzy + dvy*t
        ev = jnp.sum((beta - (px * px + py * py)) * ev_ref[4],
                     axis=0, keepdims=True)             # (1, 128), mask-weighted
        ri0 = jax.lax.broadcasted_iota(jnp.int32, (block_m, _LANES), 0)
        # NLL = nonevent - event  ->  seed accumulator with -event_chunk on row 0
        out_ref[...] = jnp.where(ri0 == 0, -ev, 0.0)

    row0 = r * block_m
    col0 = c * block_n

    def pair_integral():
        # (block_m, 1) - (1, block_n) outer differences (VPU broadcast)
        dx = z_ref[:, 0:1] - zT_ref[0:1, :]
        dy = z_ref[:, 1:2] - zT_ref[1:2, :]
        mx = v_ref[:, 0:1] - vT_ref[0:1, :]
        my = v_ref[:, 1:2] - vT_ref[1:2, :]

        a = dx * dx + dy * dy            # ||dz0||^2
        b = dx * mx + dy * my            # dz0 . dv0
        cc = mx * mx + my * my           # ||dv0||^2

        # eps clamp keeps degenerate dv == 0 pairs finite on BOTH paths (its
        # small-c limit reproduces exp(beta - a)*(tn - t0)); one vmax/elem.
        c_safe = jnp.maximum(cc, _C_EPS)
        inv_sqrt_c = jax.lax.rsqrt(c_safe)      # single EUP rsqrt, no divides
        sqrt_c = c_safe * inv_sqrt_c
        bic = b * inv_sqrt_c                    # hoisted, reused 3x

        # int_{t0}^{tn} exp(beta - (a + 2 b t + c t^2)) dt
        amp = jnp.exp(beta - a + bic * bic) * ((0.5 * _SQRT_PI) * inv_sqrt_c)
        return amp * (_erf(sqrt_c * tn + bic) - _erf(sqrt_c * t0 + bic))

    def accumulate(vals):
        # lane-group fold: (block_m, block_n) -> (block_m, 128) using static,
        # 128-aligned slices; the accumulator load/add/store stays unmasked.
        part = vals[:, 0:_LANES]
        for g in range(1, block_n // _LANES):
            part = part + vals[:, g * _LANES:(g + 1) * _LANES]
        out_ref[...] = out_ref[...] + part

    # fast path: block lies strictly above the diagonal and holds no padded
    # columns -> every element is a valid i<j pair, zero mask/select work.
    is_fast = (col0 >= row0 + block_m) & (col0 + block_n <= n_nodes)
    # masked path: block straddles the diagonal and/or the N boundary but still
    # contains at least one strict-upper element.
    has_upper = col0 + (block_n - 1) > row0

    @pl.when(is_fast)
    def _():
        accumulate(pair_integral())

    @pl.when(has_upper & jnp.logical_not(is_fast))
    def _():
        integ = pair_integral()
        ri = jax.lax.broadcasted_iota(jnp.int32, (block_m, block_n), 0)
        ci = jax.lax.broadcasted_iota(jnp.int32, (block_m, block_n), 1)
        # row < col  <=>  (ci - ri) > (row0 - col0);  col < N  <=>  ci < N - col0
        mask = ((ci - ri) > (row0 - col0)) & (ci < (n_nodes - col0))
        # keep this a select (not multiply-by-mask) so invalid lanes can never
        # propagate non-finite values.
        accumulate(jnp.where(mask, integ, 0.0))


def constant_velocity_nll(data, t0, tn, z0, v0, beta, *, block_m=None, block_n=None):
    """Negative log-likelihood; mirrors VectorizedConstantVelocityModel.forward."""
    n = int(z0.shape[0])
    m = int(data.shape[0])

    # ---- block sizing -------------------------------------------------------
    # block_n: multiple of 128 so the accumulator fold is lane-dense.
    if block_n is None:
        block_n = min(512, _LANES * pl.cdiv(n, _LANES))
    assert block_n % _LANES == 0
    # block_m: multiple of 8; chosen so small/medium N still yields R >= 2 row
    # blocks (keeps the second v7x TensorCore busy via the "parallel" row axis).
    if block_m is None:
        block_m = min(128, 8 * max(1, pl.cdiv(n, 16)))
    assert block_m % 8 == 0

    R = pl.cdiv(n, block_m)
    C = pl.cdiv(n, block_n)
    n_pad_r = R * block_m
    n_pad_c = C * block_n

    # ---- pad latent states (padded rows/cols are masked out in-kernel) ------
    z0f = jnp.asarray(z0, jnp.float32)
    v0f = jnp.asarray(v0, jnp.float32)
    z_rows = jnp.pad(z0f, ((0, n_pad_r - n), (0, 0)))          # (n_pad_r, 2)
    v_rows = jnp.pad(v0f, ((0, n_pad_r - n), (0, 0)))
    z_cols = jnp.pad(z0f, ((0, n_pad_c - n), (0, 0))).T        # (2, n_pad_c)
    v_cols = jnp.pad(v0f, ((0, n_pad_c - n), (0, 0))).T

    # ---- glue: per-event node-pair gather (plain JAX), then pack ------------
    i = jnp.floor(data[:, 0]).astype(jnp.int32)
    j = jnp.floor(data[:, 1]).astype(jnp.int32)
    times = jnp.asarray(data[:, 2], jnp.float32)
    dz = z0f[i] - z0f[j]                                       # (M, 2)
    dv = v0f[i] - v0f[j]                                       # (M, 2)

    # stacked, sublane-dense event chunks sharded across the R row blocks:
    # channels [dzx, dzy, dvx, dvy, validity_mask, time]
    rows_e = pl.cdiv(m, _LANES)
    rows_per_r = 8 * pl.cdiv(pl.cdiv(rows_e, R), 8)            # multiple of 8
    m_pad = rows_per_r * R * _LANES

    def pack(x):
        return jnp.pad(x.astype(jnp.float32), (0, m_pad - m)).reshape(
            rows_per_r * R, _LANES)

    ev_stack = jnp.stack(
        [pack(dz[:, 0]), pack(dz[:, 1]), pack(dv[:, 0]), pack(dv[:, 1]),
         pack(jnp.ones((m,), jnp.float32)), pack(times)], axis=0)  # (6, R*rows_per_r, 128)

    scal = jnp.stack([jnp.asarray(beta, jnp.float32).reshape(()),
                      jnp.asarray(t0, jnp.float32).reshape(()),
                      jnp.asarray(tn, jnp.float32).reshape(())])    # (3,) in SMEM

    partials = pl.pallas_call(
        functools.partial(_nll_kernel, block_m=block_m, block_n=block_n, n_nodes=n),
        out_shape=jax.ShapeDtypeStruct((R, block_m, _LANES), jnp.float32),
        grid=(R, C),
        in_specs=[
            pl.BlockSpec((block_m, 2), lambda r, c: (r, 0)),          # z0 rows
            pl.BlockSpec((block_m, 2), lambda r, c: (r, 0)),          # v0 rows
            pl.BlockSpec((2, block_n), lambda r, c: (0, c)),          # z0^T cols
            pl.BlockSpec((2, block_n), lambda r, c: (0, c)),          # v0^T cols
            pl.BlockSpec((6, rows_per_r, _LANES), lambda r, c: (0, r, 0)),  # event chunk
            pl.BlockSpec(memory_space=pltpu.MemorySpace.SMEM),        # beta, t0, tn
        ],
        out_specs=pl.BlockSpec((None, block_m, _LANES), lambda r, c: (r, 0, 0)),
        compiler_params=pltpu.CompilerParams(
            dimension_semantics=("parallel", "arbitrary")),
    )(z_rows, v_rows, z_cols, v_cols, ev_stack, scal)

    # tiny final reduce of per-row-block lane-dense partials (each already
    # holds "nonevent_chunk - event_chunk")
    return jnp.sum(partials)


def reference_nll(data, t0, tn, z0, v0, beta):
    """Pure-JAX reference mirroring the PyTorch forward (full (N,N,M) tensor + gather)."""
    n = z0.shape[0]
    times = data[:, 2]
    Zt = z0[:, :, None] + v0[:, :, None] * times[None, None, :]     # (N, 2, M)
    diff = Zt[:, None, :, :] - Zt[None, :, :, :]                    # (N, N, 2, M)
    d = jnp.sum(diff ** 2, axis=2)                                  # (N, N, M)
    log_int = beta[0, 0] - d
    i = jnp.floor(data[:, 0]).astype(jnp.int32)
    j = jnp.floor(data[:, 1]).astype(jnp.int32)
    t_idx = jnp.arange(data.shape[0])
    event = jnp.sum(log_int[i, j, t_idx])

    dz = z0[:, None, :] - z0[None, :, :]
    dv = v0[:, None, :] - v0[None, :, :]
    a = jnp.sum(dz ** 2, -1)
    b = jnp.sum(dz * dv, -1)
    c = jnp.sum(dv ** 2, -1)
    mask = jnp.triu(jnp.ones((n, n), bool), 1)
    c_safe = jnp.where(mask, c, 1.0)
    sqrt_c = jnp.sqrt(c_safe)
    amp = jnp.exp(beta[0, 0] - a + b * b / c_safe) * jnp.sqrt(jnp.pi) / (2.0 * sqrt_c)
    integ = amp * (jax.scipy.special.erf(sqrt_c * tn + b / sqrt_c)
                   - jax.scipy.special.erf(sqrt_c * t0 + b / sqrt_c))
    nonevent = jnp.sum(jnp.where(mask, integ, 0.0))
    return -(event - nonevent)


if __name__ == "__main__":
    key = jax.random.PRNGKey(0)
    k1, k2, k3, k4, k5 = jax.random.split(key, 5)

    N = 64            # n_points
    M = 256           # number of interaction events
    t0 = jnp.float32(0.0)
    tn = jnp.float32(10.0)

    # deterministic parameter init (matches torch.rand(N,2)*0.5 shapes, beta=[[1.0]])
    beta = jnp.array([[1.0]], dtype=jnp.float32)
    z0 = jax.random.uniform(k1, (N, 2), jnp.float32) * 0.5
    v0 = jax.random.uniform(k2, (N, 2), jnp.float32) * 0.5

    # data columns: [node_i, node_j, time]
    node_i = jax.random.randint(k3, (M,), 0, N).astype(jnp.float32)
    node_j = jax.random.randint(k4, (M,), 0, N).astype(jnp.float32)
    times = jax.random.uniform(k5, (M,), jnp.float32, minval=0.0, maxval=10.0)
    data = jnp.stack([node_i, node_j, times], axis=1)    # (M, 3)

    nll = constant_velocity_nll(data, t0, tn, z0, v0, beta)
    nll = jax.block_until_ready(nll)

    ref = jax.block_until_ready(reference_nll(data, t0, tn, z0, v0, beta))
    assert jnp.isfinite(nll), nll
    assert jnp.allclose(nll, ref, rtol=5e-3, atol=0.5), (nll, ref)

    print("KERNEL_OK")
</pallas_src>

<mosaic_0001>
module attributes {stable_mosaic.version = 11 : i64} {
  func.func @_nll_kernel(%arg0: i32, %arg1: i32, %arg2: memref<32x2xf32, #tpu.memory_space<vmem>>, %arg3: memref<32x2xf32, #tpu.memory_space<vmem>>, %arg4: memref<2x128xf32, #tpu.memory_space<vmem>>, %arg5: memref<2x128xf32, #tpu.memory_space<vmem>>, %arg6: memref<6x8x128xf32, #tpu.memory_space<vmem>>, %arg7: memref<3xf32, #tpu.memory_space<smem>>, %arg8: memref<1x32x128xf32, #tpu.memory_space<vmem>>) attributes {dimension_semantics = [#tpu.dimension_semantics<parallel>, #tpu.dimension_semantics<arbitrary>], iteration_bounds = array<i64: 2, 1>, scalar_prefetch = 0 : i64, scratch_operands = 0 : i64, tpu.core_type = #tpu.core_type<tc>, window_params = [{transform_indices = @transform_0, window_bounds = array<i64: 32, 2>}, {transform_indices = @transform_1, window_bounds = array<i64: 32, 2>}, {transform_indices = @transform_2, window_bounds = array<i64: 2, 128>}, {transform_indices = @transform_3, window_bounds = array<i64: 2, 128>}, {transform_indices = @transform_4, window_bounds = array<i64: 6, 8, 128>}, {transform_indices = @transform_5, window_bounds = array<i64: 3>}, {transform_indices = @transform_6, window_bounds = array<i64: 1, 32, 128>}]} {
    %c0 = arith.constant 0 : index
    %0 = memref.load %arg7[%c0] : memref<3xf32, #tpu.memory_space<smem>>
    %c1 = arith.constant 1 : index
    %1 = memref.load %arg7[%c1] : memref<3xf32, #tpu.memory_space<smem>>
    %c2 = arith.constant 2 : index
    %2 = memref.load %arg7[%c2] : memref<3xf32, #tpu.memory_space<smem>>
    %c0_i32 = arith.constant 0 : i32
    %3 = arith.cmpi eq, %arg1, %c0_i32 : i32
    %4 = arith.extui %3 : i1 to i32
    %c0_i32_0 = arith.constant 0 : i32
    %5 = arith.cmpi ne, %4, %c0_i32_0 : i32
    scf.if %5 {
      %c5 = arith.constant 5 : index
      %c0_5 = arith.constant 0 : index
      %c0_6 = arith.constant 0 : index
      %21 = vector.load %arg6[%c5, %c0_5, %c0_6] : memref<6x8x128xf32, #tpu.memory_space<vmem>>, vector<1x8x128xf32>
      %22 = vector.shape_cast %21 : vector<1x8x128xf32> to vector<8x128xf32>
      %c0_7 = arith.constant 0 : index
      %c0_8 = arith.constant 0 : index
      %c0_9 = arith.constant 0 : index
      %23 = vector.load %arg6[%c0_7, %c0_8, %c0_9] : memref<6x8x128xf32, #tpu.memory_space<vmem>>, vector<1x8x128xf32>
      %24 = vector.shape_cast %23 : vector<1x8x128xf32> to vector<8x128xf32>
      %c2_10 = arith.constant 2 : index
      %c0_11 = arith.constant 0 : index
      %c0_12 = arith.constant 0 : index
      %25 = vector.load %arg6[%c2_10, %c0_11, %c0_12] : memref<6x8x128xf32, #tpu.memory_space<vmem>>, vector<1x8x128xf32>
      %26 = vector.shape_cast %25 : vector<1x8x128xf32> to vector<8x128xf32>
      %27 = arith.mulf %26, %22 : vector<8x128xf32>
      %28 = arith.addf %24, %27 : vector<8x128xf32>
      %c1_13 = arith.constant 1 : index
      %c0_14 = arith.constant 0 : index
      %c0_15 = arith.constant 0 : index
      %29 = vector.load %arg6[%c1_13, %c0_14, %c0_15] : memref<6x8x128xf32, #tpu.memory_space<vmem>>, vector<1x8x128xf32>
      %30 = vector.shape_cast %29 : vector<1x8x128xf32> to vector<8x128xf32>
      %c3 = arith.constant 3 : index
      %c0_16 = arith.constant 0 : index
      %c0_17 = arith.constant 0 : index
      %31 = vector.load %arg6[%c3, %c0_16, %c0_17] : memref<6x8x128xf32, #tpu.memory_space<vmem>>, vector<1x8x128xf32>
      %32 = vector.shape_cast %31 : vector<1x8x128xf32> to vector<8x128xf32>
      %33 = arith.mulf %32, %22 : vector<8x128xf32>
      %34 = arith.addf %30, %33 : vector<8x128xf32>
      %35 = arith.mulf %28, %28 : vector<8x128xf32>
      %36 = arith.mulf %34, %34 : vector<8x128xf32>
      %37 = arith.addf %35, %36 : vector<8x128xf32>
      %38 = vector.broadcast %0 : f32 to vector<8x128xf32>
      %39 = arith.subf %38, %37 : vector<8x128xf32>
      %c4 = arith.constant 4 : index
      %c0_18 = arith.constant 0 : index
      %c0_19 = arith.constant 0 : index
      %40 = vector.load %arg6[%c4, %c0_18, %c0_19] : memref<6x8x128xf32, #tpu.memory_space<vmem>>, vector<1x8x128xf32>
      %41 = vector.shape_cast %40 : vector<1x8x128xf32> to vector<8x128xf32>
      %42 = arith.mulf %39, %41 : vector<8x128xf32>
      %cst = arith.constant dense<0.000000e+00> : vector<128xf32>
      %43 = vector.multi_reduction <add>, %42, %cst [0] : vector<8x128xf32> to vector<128xf32>
      %44 = vector.shape_cast %43 : vector<128xf32> to vector<1x128xf32>
      %45 = tpu.iota {dimensions = array<i32: 0>} : vector<32x128xi32>
      %c0_i32_20 = arith.constant 0 : i32
      %46 = vector.broadcast %c0_i32_20 : i32 to vector<32x128xi32>
      %47 = arith.cmpi eq, %45, %46 : vector<32x128xi32>
      %cst_21 = arith.constant 0.000000e+00 : f32
      %48 = vector.broadcast %cst_21 : f32 to vector<1x128xf32>
      %49 = arith.subf %48, %44 : vector<1x128xf32>
      %cst_22 = arith.constant 0.000000e+00 : f32
      %50 = vector.shape_cast %49 : vector<1x128xf32> to vector<1x128xf32>
      %51 = vector.broadcast %50 : vector<1x128xf32> to vector<32x128xf32>
      %52 = vector.broadcast %cst_22 : f32 to vector<32x128xf32>
      %53 = arith.select %47, %51, %52 : vector<32x128xi1>, vector<32x128xf32>
      %c0_23 = arith.constant 0 : index
      %c0_24 = arith.constant 0 : index
      %c0_25 = arith.constant 0 : index
      %54 = vector.load %arg8[%c0_23, %c0_24, %c0_25] : memref<1x32x128xf32, #tpu.memory_space<vmem>>, vector<1x32x128xf32>
      %55 = vector.shape_cast %54 : vector<1x32x128xf32> to vector<32x128xf32>
      %56 = vector.shape_cast %53 : vector<32x128xf32> to vector<1x32x128xf32>
      tpu.vector_store %arg8[%c0_23, %c0_24, %c0_25], %56 {strides = array<i32>} : memref<1x32x128xf32, #tpu.memory_space<vmem>>, vector<1x32x128xf32>,
    } else {
    }
    %c32_i32 = arith.constant 32 : i32
    %6 = arith.muli %arg0, %c32_i32 : i32
    %c128_i32 = arith.constant 128 : i32
    %7 = arith.muli %arg1, %c128_i32 : i32
    %c32_i32_1 = arith.constant 32 : i32
    %8 = arith.addi %6, %c32_i32_1 : i32
    %9 = arith.cmpi sge, %7, %8 : i32
    %c128_i32_2 = arith.constant 128 : i32
    %10 = arith.addi %7, %c128_i32_2 : i32
    %c64_i32 = arith.constant 64 : i32
    %11 = arith.cmpi sle, %10, %c64_i32 : i32
    %12 = arith.andi %9, %11 : i1
    %c127_i32 = arith.constant 127 : i32
    %13 = arith.addi %7, %c127_i32 : i32
    %14 = arith.cmpi sgt, %13, %6 : i32
    %15 = arith.extui %12 : i1 to i32
    %c0_i32_3 = arith.constant 0 : i32
    %16 = arith.cmpi ne, %15, %c0_i32_3 : i32
    scf.if %16 {
      %c0_5 = arith.constant 0 : index
      %c0_6 = arith.constant 0 : index
      %21 = vector.load %arg2[%c0_5, %c0_6] : memref<32x2xf32, #tpu.memory_space<vmem>>, vector<32x1xf32>
      %c0_7 = arith.constant 0 : index
      %c0_8 = arith.constant 0 : index
      %22 = vector.load %arg4[%c0_7, %c0_8] : memref<2x128xf32, #tpu.memory_space<vmem>>, vector<1x128xf32>
      %23 = vector.broadcast %21 : vector<32x1xf32> to vector<32x128xf32>
      %24 = vector.broadcast %22 : vector<1x128xf32> to vector<32x128xf32>
      %25 = arith.subf %23, %24 : vector<32x128xf32>
      %c0_9 = arith.constant 0 : index
      %c1_10 = arith.constant 1 : index
      %26 = vector.load %arg2[%c0_9, %c1_10] : memref<32x2xf32, #tpu.memory_space<vmem>>, vector<32x1xf32>
      %c1_11 = arith.constant 1 : index
      %c0_12 = arith.constant 0 : index
      %27 = vector.load %arg4[%c1_11, %c0_12] : memref<2x128xf32, #tpu.memory_space<vmem>>, vector<1x128xf32>
      %28 = vector.broadcast %26 : vector<32x1xf32> to vector<32x128xf32>
      %29 = vector.broadcast %27 : vector<1x128xf32> to vector<32x128xf32>
      %30 = arith.subf %28, %29 : vector<32x128xf32>
      %c0_13 = arith.constant 0 : index
      %c0_14 = arith.constant 0 : index
      %31 = vector.load %arg3[%c0_13, %c0_14] : memref<32x2xf32, #tpu.memory_space<vmem>>, vector<32x1xf32>
      %c0_15 = arith.constant 0 : index
      %c0_16 = arith.constant 0 : index
      %32 = vector.load %arg5[%c0_15, %c0_16] : memref<2x128xf32, #tpu.memory_space<vmem>>, vector<1x128xf32>
      %33 = vector.broadcast %31 : vector<32x1xf32> to vector<32x128xf32>
      %34 = vector.broadcast %32 : vector<1x128xf32> to vector<32x128xf32>
      %35 = arith.subf %33, %34 : vector<32x128xf32>
      %c0_17 = arith.constant 0 : index
      %c1_18 = arith.constant 1 : index
      %36 = vector.load %arg3[%c0_17, %c1_18] : memref<32x2xf32, #tpu.memory_space<vmem>>, vector<32x1xf32>
      %c1_19 = arith.constant 1 : index
      %c0_20 = arith.constant 0 : index
      %37 = vector.load %arg5[%c1_19, %c0_20] : memref<2x128xf32, #tpu.memory_space<vmem>>, vector<1x128xf32>
      %38 = vector.broadcast %36 : vector<32x1xf32> to vector<32x128xf32>
      %39 = vector.broadcast %37 : vector<1x128xf32> to vector<32x128xf32>
      %40 = arith.subf %38, %39 : vector<32x128xf32>
      %41 = arith.mulf %25, %25 : vector<32x128xf32>
      %42 = arith.mulf %30, %30 : vector<32x128xf32>
      %43 = arith.addf %41, %42 : vector<32x128xf32>
      %44 = arith.mulf %25, %35 : vector<32x128xf32>
      %45 = arith.mulf %30, %40 : vector<32x128xf32>
      %46 = arith.addf %44, %45 : vector<32x128xf32>
      %47 = arith.mulf %35, %35 : vector<32x128xf32>
      %48 = arith.mulf %40, %40 : vector<32x128xf32>
      %49 = arith.addf %47, %48 : vector<32x128xf32>
      %cst = arith.constant 9.99999996E-13 : f32
      %50 = vector.broadcast %cst : f32 to vector<32x128xf32>
      %51 = arith.maximumf %49, %50 : vector<32x128xf32>
      %52 = math.rsqrt %51 : vector<32x128xf32>
      %53 = arith.mulf %51, %52 : vector<32x128xf32>
      %54 = arith.mulf %46, %52 : vector<32x128xf32>
      %55 = vector.broadcast %0 : f32 to vector<32x128xf32>
      %56 = arith.subf %55, %43 : vector<32x128xf32>
      %57 = arith.mulf %54, %54 : vector<32x128xf32>
      %58 = arith.addf %56, %57 : vector<32x128xf32>
      %59 = math.exp %58 : vector<32x128xf32>
      %cst_21 = arith.constant 0.886226952 : f32
      %60 = vector.broadcast %cst_21 : f32 to vector<32x128xf32>
      %61 = arith.mulf %60, %52 : vector<32x128xf32>
      %62 = arith.mulf %59, %61 : vector<32x128xf32>
      %63 = vector.broadcast %2 : f32 to vector<32x128xf32>
      %64 = arith.mulf %53, %63 : vector<32x128xf32>
      %65 = arith.addf %64, %54 : vector<32x128xf32>
      %66 = arith.mulf %65, %65 : vector<32x128xf32>
      %cst_22 = arith.constant 0.100911304 : f32
      %67 = vector.broadcast %cst_22 : f32 to vector<32x128xf32>
      %68 = arith.mulf %67, %66 : vector<32x128xf32>
      %cst_23 = arith.constant 1.12837923 : f32
      %69 = vector.broadcast %cst_23 : f32 to vector<32x128xf32>
      %70 = arith.addf %69, %68 : vector<32x128xf32>
      %71 = arith.mulf %65, %70 : vector<32x128xf32>
      %72 = math.tanh %71 : vector<32x128xf32>
      %73 = vector.broadcast %1 : f32 to vector<32x128xf32>
      %74 = arith.mulf %53, %73 : vector<32x128xf32>
      %75 = arith.addf %74, %54 : vector<32x128xf32>
      %76 = arith.mulf %75, %75 : vector<32x128xf32>
      %cst_24 = arith.constant 0.100911304 : f32
      %77 = vector.broadcast %cst_24 : f32 to vector<32x128xf32>
      %78 = arith.mulf %77, %76 : vector<32x128xf32>
      %cst_25 = arith.constant 1.12837923 : f32
      %79 = vector.broadcast %cst_25 : f32 to vector<32x128xf32>
      %80 = arith.addf %79, %78 : vector<32x128xf32>
      %81 = arith.mulf %75, %80 : vector<32x128xf32>
      %82 = math.tanh %81 : vector<32x128xf32>
      %83 = arith.subf %72, %82 : vector<32x128xf32>
      %84 = arith.mulf %62, %83 : vector<32x128xf32>
      %c0_26 = arith.constant 0 : index
      %c0_27 = arith.constant 0 : index
      %c0_28 = arith.constant 0 : index
      %85 = vector.load %arg8[%c0_26, %c0_27, %c0_28] : memref<1x32x128xf32, #tpu.memory_space<vmem>>, vector<1x32x128xf32>
      %86 = vector.shape_cast %85 : vector<1x32x128xf32> to vector<32x128xf32>
      %87 = arith.addf %86, %84 : vector<32x128xf32>
      %c0_29 = arith.constant 0 : index
      %c0_30 = arith.constant 0 : index
      %c0_31 = arith.constant 0 : index
      %88 = vector.load %arg8[%c0_29, %c0_30, %c0_31] : memref<1x32x128xf32, #tpu.memory_space<vmem>>, vector<1x32x128xf32>
      %89 = vector.shape_cast %88 : vector<1x32x128xf32> to vector<32x128xf32>
      %90 = vector.shape_cast %87 : vector<32x128xf32> to vector<1x32x128xf32>
      tpu.vector_store %arg8[%c0_29, %c0_30, %c0_31], %90 {strides = array<i32>} : memref<1x32x128xf32, #tpu.memory_space<vmem>>, vector<1x32x128xf32>,
    } else {
    }
    %true = arith.constant true
    %17 = arith.xori %12, %true : i1
    %18 = arith.andi %14, %17 : i1
    %19 = arith.extui %18 : i1 to i32
    %c0_i32_4 = arith.constant 0 : i32
    %20 = arith.cmpi ne, %19, %c0_i32_4 : i32
    scf.if %20 {
      %c0_5 = arith.constant 0 : index
      %c0_6 = arith.constant 0 : index
      %21 = vector.load %arg2[%c0_5, %c0_6] : memref<32x2xf32, #tpu.memory_space<vmem>>, vector<32x1xf32>
      %c0_7 = arith.constant 0 : index
      %c0_8 = arith.constant 0 : index
      %22 = vector.load %arg4[%c0_7, %c0_8] : memref<2x128xf32, #tpu.memory_space<vmem>>, vector<1x128xf32>
      %23 = vector.broadcast %21 : vector<32x1xf32> to vector<32x128xf32>
      %24 = vector.broadcast %22 : vector<1x128xf32> to vector<32x128xf32>
      %25 = arith.subf %23, %24 : vector<32x128xf32>
      %c0_9 = arith.constant 0 : index
      %c1_10 = arith.constant 1 : index
      %26 = vector.load %arg2[%c0_9, %c1_10] : memref<32x2xf32, #tpu.memory_space<vmem>>, vector<32x1xf32>
      %c1_11 = arith.constant 1 : index
      %c0_12 = arith.constant 0 : index
      %27 = vector.load %arg4[%c1_11, %c0_12] : memref<2x128xf32, #tpu.memory_space<vmem>>, vector<1x128xf32>
      %28 = vector.broadcast %26 : vector<32x1xf32> to vector<32x128xf32>
      %29 = vector.broadcast %27 : vector<1x128xf32> to vector<32x128xf32>
      %30 = arith.subf %28, %29 : vector<32x128xf32>
      %c0_13 = arith.constant 0 : index
      %c0_14 = arith.constant 0 : index
      %31 = vector.load %arg3[%c0_13, %c0_14] : memref<32x2xf32, #tpu.memory_space<vmem>>, vector<32x1xf32>
      %c0_15 = arith.constant 0 : index
      %c0_16 = arith.constant 0 : index
      %32 = vector.load %arg5[%c0_15, %c0_16] : memref<2x128xf32, #tpu.memory_space<vmem>>, vector<1x128xf32>
      %33 = vector.broadcast %31 : vector<32x1xf32> to vector<32x128xf32>
      %34 = vector.broadcast %32 : vector<1x128xf32> to vector<32x128xf32>
      %35 = arith.subf %33, %34 : vector<32x128xf32>
      %c0_17 = arith.constant 0 : index
      %c1_18 = arith.constant 1 : index
      %36 = vector.load %arg3[%c0_17, %c1_18] : memref<32x2xf32, #tpu.memory_space<vmem>>, vector<32x1xf32>
      %c1_19 = arith.constant 1 : index
      %c0_20 = arith.constant 0 : index
      %37 = vector.load %arg5[%c1_19, %c0_20] : memref<2x128xf32, #tpu.memory_space<vmem>>, vector<1x128xf32>
      %38 = vector.broadcast %36 : vector<32x1xf32> to vector<32x128xf32>
      %39 = vector.broadcast %37 : vector<1x128xf32> to vector<32x128xf32>
      %40 = arith.subf %38, %39 : vector<32x128xf32>
      %41 = arith.mulf %25, %25 : vector<32x128xf32>
      %42 = arith.mulf %30, %30 : vector<32x128xf32>
      %43 = arith.addf %41, %42 : vector<32x128xf32>
      %44 = arith.mulf %25, %35 : vector<32x128xf32>
      %45 = arith.mulf %30, %40 : vector<32x128xf32>
      %46 = arith.addf %44, %45 : vector<32x128xf32>
      %47 = arith.mulf %35, %35 : vector<32x128xf32>
      %48 = arith.mulf %40, %40 : vector<32x128xf32>
      %49 = arith.addf %47, %48 : vector<32x128xf32>
      %cst = arith.constant 9.99999996E-13 : f32
      %50 = vector.broadcast %cst : f32 to vector<32x128xf32>
      %51 = arith.maximumf %49, %50 : vector<32x128xf32>
      %52 = math.rsqrt %51 : vector<32x128xf32>
      %53 = arith.mulf %51, %52 : vector<32x128xf32>
      %54 = arith.mulf %46, %52 : vector<32x128xf32>
      %55 = vector.broadcast %0 : f32 to vector<32x128xf32>
      %56 = arith.subf %55, %43 : vector<32x128xf32>
      %57 = arith.mulf %54, %54 : vector<32x128xf32>
      %58 = arith.addf %56, %57 : vector<32x128xf32>
      %59 = math.exp %58 : vector<32x128xf32>
      %cst_21 = arith.constant 0.886226952 : f32
      %60 = vector.broadcast %cst_21 : f32 to vector<32x128xf32>
      %61 = arith.mulf %60, %52 : vector<32x128xf32>
      %62 = arith.mulf %59, %61 : vector<32x128xf32>
      %63 = vector.broadcast %2 : f32 to vector<32x128xf32>
      %64 = arith.mulf %53, %63 : vector<32x128xf32>
      %65 = arith.addf %64, %54 : vector<32x128xf32>
      %66 = arith.mulf %65, %65 : vector<32x128xf32>
      %cst_22 = arith.constant 0.100911304 : f32
      %67 = vector.broadcast %cst_22 : f32 to vector<32x128xf32>
      %68 = arith.mulf %67, %66 : vector<32x128xf32>
      %cst_23 = arith.constant 1.12837923 : f32
      %69 = vector.broadcast %cst_23 : f32 to vector<32x128xf32>
      %70 = arith.addf %69, %68 : vector<32x128xf32>
      %71 = arith.mulf %65, %70 : vector<32x128xf32>
      %72 = math.tanh %71 : vector<32x128xf32>
      %73 = vector.broadcast %1 : f32 to vector<32x128xf32>
      %74 = arith.mulf %53, %73 : vector<32x128xf32>
      %75 = arith.addf %74, %54 : vector<32x128xf32>
      %76 = arith.mulf %75, %75 : vector<32x128xf32>
      %cst_24 = arith.constant 0.100911304 : f32
      %77 = vector.broadcast %cst_24 : f32 to vector<32x128xf32>
      %78 = arith.mulf %77, %76 : vector<32x128xf32>
      %cst_25 = arith.constant 1.12837923 : f32
      %79 = vector.broadcast %cst_25 : f32 to vector<32x128xf32>
      %80 = arith.addf %79, %78 : vector<32x128xf32>
      %81 = arith.mulf %75, %80 : vector<32x128xf32>
      %82 = math.tanh %81 : vector<32x128xf32>
      %83 = arith.subf %72, %82 : vector<32x128xf32>
      %84 = arith.mulf %62, %83 : vector<32x128xf32>
      %85 = tpu.iota {dimensions = array<i32: 0>} : vector<32x128xi32>
      %86 = tpu.iota {dimensions = array<i32: 1>} : vector<32x128xi32>
      %87 = arith.subi %86, %85 : vector<32x128xi32>
      %88 = arith.subi %6, %7 : i32
      %89 = vector.broadcast %88 : i32 to vector<32x128xi32>
      %90 = arith.cmpi sgt, %87, %89 : vector<32x128xi32>
      %c64_i32_26 = arith.constant 64 : i32
      %91 = arith.subi %c64_i32_26, %7 : i32
      %92 = vector.broadcast %91 : i32 to vector<32x128xi32>
      %93 = arith.cmpi slt, %86, %92 : vector<32x128xi32>
      %94 = arith.andi %90, %93 : vector<32x128xi1>
      %cst_27 = arith.constant 0.000000e+00 : f32
      %95 = vector.broadcast %cst_27 : f32 to vector<32x128xf32>
      %96 = arith.select %94, %84, %95 : vector<32x128xi1>, vector<32x128xf32>
      %c0_28 = arith.constant 0 : index
      %c0_29 = arith.constant 0 : index
      %c0_30 = arith.constant 0 : index
      %97 = vector.load %arg8[%c0_28, %c0_29, %c0_30] : memref<1x32x128xf32, #tpu.memory_space<vmem>>, vector<1x32x128xf32>
      %98 = vector.shape_cast %97 : vector<1x32x128xf32> to vector<32x128xf32>
      %99 = arith.addf %98, %96 : vector<32x128xf32>
      %c0_31 = arith.constant 0 : index
      %c0_32 = arith.constant 0 : index
      %c0_33 = arith.constant 0 : index
      %100 = vector.load %arg8[%c0_31, %c0_32, %c0_33] : memref<1x32x128xf32, #tpu.memory_space<vmem>>, vector<1x32x128xf32>
      %101 = vector.shape_cast %100 : vector<1x32x128xf32> to vector<32x128xf32>
      %102 = vector.shape_cast %99 : vector<32x128xf32> to vector<1x32x128xf32>
      tpu.vector_store %arg8[%c0_31, %c0_32, %c0_33], %102 {strides = array<i32>} : memref<1x32x128xf32, #tpu.memory_space<vmem>>, vector<1x32x128xf32>,
    } else {
    }
    return
  }
  func.func @transform_0(%arg0: i32, %arg1: i32) -> (i32, i32) {
    %c0_i32 = arith.constant 0 : i32
    %c0_i32_0 = arith.constant 0 : i32
    return %arg0, %c0_i32 : i32, i32
  }
  func.func @transform_1(%arg0: i32, %arg1: i32) -> (i32, i32) {
    %c0_i32 = arith.constant 0 : i32
    %c0_i32_0 = arith.constant 0 : i32
    return %arg0, %c0_i32 : i32, i32
  }
  func.func @transform_2(%arg0: i32, %arg1: i32) -> (i32, i32) {
    %c0_i32 = arith.constant 0 : i32
    %c0_i32_0 = arith.constant 0 : i32
    return %c0_i32, %arg1 : i32, i32
  }
  func.func @transform_3(%arg0: i32, %arg1: i32) -> (i32, i32) {
    %c0_i32 = arith.constant 0 : i32
    %c0_i32_0 = arith.constant 0 : i32
    return %c0_i32, %arg1 : i32, i32
  }
  func.func @transform_4(%arg0: i32, %arg1: i32) -> (i32, i32, i32) {
    %c0_i32 = arith.constant 0 : i32
    %c0_i32_0 = arith.constant 0 : i32
    %c0_i32_1 = arith.constant 0 : i32
    return %c0_i32, %arg0, %c0_i32_0 : i32, i32, i32
  }
  func.func @transform_5(%arg0: i32, %arg1: i32) -> i32 {
    %c0_i32 = arith.constant 0 : i32
    %c0_i32_0 = arith.constant 0 : i32
    return %c0_i32 : i32
  }
  func.func @transform_6(%arg0: i32, %arg1: i32) -> (i32, i32, i32) {
    %c0_i32 = arith.constant 0 : i32
    %c0_i32_0 = arith.constant 0 : i32
    %c0_i32_1 = arith.constant 0 : i32
    return %arg0, %c0_i32, %c0_i32_0 : i32, i32, i32
  }
}

</mosaic_0001>

<llo_original>
// kernel: tpu_custom_call.1
$region0: #{tpu_custom_call.1}
  #allocation0 [shape = 'u32[]', space=smem, size = 0x4, offset = 0x4, fixed_abs, tag = 'smem constant byte address 0x4 - core index']
  #allocation1 [shape = 'u32[144,128]{1,0:T(1,128)}', space=vmem, size = 0x12000, scoped, tag = 'internal scratch']
  %s0 = inlined_call_operand.vmem [shape: f32[64,2], index: 0, kind: input, shape index: {}]
  %s1 = inlined_call_operand.vmem [shape: f32[64,2], index: 1, kind: input, shape index: {}]
  %s2 = inlined_call_operand.vmem [shape: f32[2,128], index: 2, kind: input, shape index: {}]
  %s3 = inlined_call_operand.vmem [shape: f32[2,128], index: 3, kind: input, shape index: {}]
  %s4 = inlined_call_operand.vmem [shape: f32[6,16,128], index: 4, kind: input, shape index: {}]
  %s5 = inlined_call_operand.vmem [shape: f32[3], index: 5, kind: input, shape index: {}]
  %s6 = inlined_call_operand.hbm [shape: f32[2,32,128], index: 6, kind: output, shape index: {}]
  %s7 = sld [smem:[#allocation0]]
  $region111: #{tpu_custom_call.1} parent=0
    _
  %s9 = ssub.s32 1, %s7
  %s10 = scalar_select 0, %s9, %s7
  $region1: #{tpu_custom_call.1} parent=0
    #allocation2 [shape = 'u8[49152]{0}', space=vmem, size = 0xc000, scoped, tag = 'input window, operand 4']
    #allocation3 [shape = 'u8[512]{0}', space=smem, size = 0x200, scoped, tag = 'input window, operand 5, single buffered']
    #allocation4 [shape = 's32[2]{0}', space=sflag, size = 0x8, scoped, tag = 'scoped memory for tpu_custom_call.1']
    #allocation5 [shape = 's32[2]{0}', space=sflag, size = 0x8, scoped, tag = 'scoped memory for tpu_custom_call.1']
    #allocation6 [shape = 'u8[32768]{0}', space=vmem, size = 0x8000, scoped, tag = 'output window, operand 0']
    %11 = vsyncpa [#allocation5], 0
    %12 = vsyncpa [#allocation4], 0
    %s13 = scalar_lea.sflag [#allocation4], 1
    %14 = vsyncpa %s13, 0
    loop: start=0, step=1, limit=4
    $region2: #{tpu_custom_call.1} parent=1 // loop_pre_header
      _
    $region3: #{tpu_custom_call.1} parent=1 // loop_header
      %s16 = sphi 0, %s20
      %p17 = scmp.ge.s32.totalorder %s16, 4
      %s23 = sphi 0, %s35
      %s24 = sphi 0, %s31
      %s25 = sphi 0, %s23
      %s26 = sphi 0, %s24
      %s27 = sphi 0, %s25
      %s28 = sphi 0, %s26
      %s38 = sphi 0, %s40
      %s41 = sphi 0, %s38
      %s42 = sphi 0, %s41
      %s58 = sphi 0, %s42
      %s64 = sphi 0, %s66
      %s67 = sphi 0, %s64
      %s68 = sphi 0, %s67
      %s84 = sphi 0, %s68
      %s90 = sphi 0, %s92
      %s93 = sphi 0, %s90
      %s94 = sphi 0, %s93
      %s110 = sphi 0, %s94
      %s116 = sphi 0, %s118
      %s119 = sphi 0, %s116
      %s120 = sphi 0, %s119
      %s136 = sphi 0, %s120
      %s142 = sphi 0, %s144
      %s145 = sphi 0, %s142
      %s146 = sphi 0, %s145
      %s162 = sphi 0, %s146
      %s166 = sphi 0, %s166
      %s168 = sphi 0, %s166
      %s169 = sphi 0, %s168
      %s183 = sphi 0, %s169
      %s189 = sphi 0, %s191
      %s192 = sphi 0, %s189
      %s193 = sphi 0, %s192
      %s209 = sphi 0, %s193
    $region4: #{tpu_custom_call.1} parent=1 // loop_header_branch
      %19 = sbr.rel (%p17) target = $region8
    $region5: #{tpu_custom_call.1} parent=1 // loop_body
      %s21 = ssub.s32 %s16, 1
      %s22 = ssub.s32 %s16, 2
      %s29 = sadd.s32 1, %s24
      %p30 = scmp.ge.s32.totalorder %s29, 1
      %s31 = scalar_select %p30, 0, %s29
      %s32 = sadd.s32 1, %s23
      %s33 = scalar_select %p30, %s32, %s23
      %p34 = scmp.ge.s32.totalorder %s33, 2
      %s35 = scalar_select %p34, 0, %s33
      %s36 = ssub.s32 %s23, %s35
      %p37 = scmp.eq.s32.totalorder %s36, 0
      %s39 = sadd.s32 %s38, 1
      %s40 = scalar_select %p37, %s38, %s39
      %p43 = pneg %p37
      %p44 = scmp.eq.s32.totalorder %s16, 1
      %p45 = por %p43, %p44
      %p46 = scmp.ne.s32.totalorder %s38, %s41
      %p47 = scmp.eq.s32.totalorder %s16, 0
      %p48 = por %p46, %p47
      %p49 = scmp.ne.s32.totalorder %s38, %s41
      %p50 = scmp.eq.s32.totalorder %s21, 1
      %p51 = por %p49, %p50
      %p52 = scmp.ne.s32.totalorder %s41, %s42
      %p53 = scmp.eq.s32.totalorder %s21, 0
      %p54 = por %p52, %p53
      %p55 = scmp.ne.s32.totalorder %s41, %s42
      %p56 = scmp.eq.s32.totalorder %s22, 1
      %p57 = por %p55, %p56
      %p59 = scmp.ne.s32.totalorder %s42, %s58
      %p60 = scmp.eq.s32.totalorder %s22, 0
      %p61 = por %p59, %p60
      %s62 = ssub.s32 %s23, %s35
      %p63 = scmp.eq.s32.totalorder %s62, 0
      %s65 = sadd.s32 %s64, 1
      %s66 = scalar_select %p63, %s64, %s65
      %p69 = pneg %p63
      %p70 = scmp.eq.s32.totalorder %s16, 1
      %p71 = por %p69, %p70
      %p72 = scmp.ne.s32.totalorder %s64, %s67
      %p73 = scmp.eq.s32.totalorder %s16, 0
      %p74 = por %p72, %p73
      %p75 = scmp.ne.s32.totalorder %s64, %s67
      %p76 = scmp.eq.s32.totalorder %s21, 1
      %p77 = por %p75, %p76
      %p78 = scmp.ne.s32.totalorder %s67, %s68
      %p79 = scmp.eq.s32.totalorder %s21, 0
      %p80 = por %p78, %p79
      %p81 = scmp.ne.s32.totalorder %s67, %s68
      %p82 = scmp.eq.s32.totalorder %s22, 1
      %p83 = por %p81, %p82
      %p85 = scmp.ne.s32.totalorder %s68, %s84
      %p86 = scmp.eq.s32.totalorder %s22, 0
      %p87 = por %p85, %p86
      %s88 = ssub.s32 %s24, %s31
      %p89 = scmp.eq.s32.totalorder %s88, 0
      %s91 = sadd.s32 %s90, 1
      %s92 = scalar_select %p89, %s90, %s91
      %p95 = pneg %p89
      %p96 = scmp.eq.s32.totalorder %s16, 1
      %p97 = por %p95, %p96
      %p98 = scmp.ne.s32.totalorder %s90, %s93
      %p99 = scmp.eq.s32.totalorder %s16, 0
      %p100 = por %p98, %p99
      %p101 = scmp.ne.s32.totalorder %s90, %s93
      %p102 = scmp.eq.s32.totalorder %s21, 1
      %p103 = por %p101, %p102
      %p104 = scmp.ne.s32.totalorder %s93, %s94
      %p105 = scmp.eq.s32.totalorder %s21, 0
      %p106 = por %p104, %p105
      %p107 = scmp.ne.s32.totalorder %s93, %s94
      %p108 = scmp.eq.s32.totalorder %s22, 1
      %p109 = por %p107, %p108
      %p111 = scmp.ne.s32.totalorder %s94, %s110
      %p112 = scmp.eq.s32.totalorder %s22, 0
      %p113 = por %p111, %p112
      %s114 = ssub.s32 %s24, %s31
      %p115 = scmp.eq.s32.totalorder %s114, 0
      %s117 = sadd.s32 %s116, 1
      %s118 = scalar_select %p115, %s116, %s117
      %p121 = pneg %p115
      %p122 = scmp.eq.s32.totalorder %s16, 1
      %p123 = por %p121, %p122
      %p124 = scmp.ne.s32.totalorder %s116, %s119
      %p125 = scmp.eq.s32.totalorder %s16, 0
      %p126 = por %p124, %p125
      %p127 = scmp.ne.s32.totalorder %s116, %s119
      %p128 = scmp.eq.s32.totalorder %s21, 1
      %p129 = por %p127, %p128
      %p130 = scmp.ne.s32.totalorder %s119, %s120
      %p131 = scmp.eq.s32.totalorder %s21, 0
      %p132 = por %p130, %p131
      %p133 = scmp.ne.s32.totalorder %s119, %s120
      %p134 = scmp.eq.s32.totalorder %s22, 1
      %p135 = por %p133, %p134
      %p137 = scmp.ne.s32.totalorder %s120, %s136
      %p138 = scmp.eq.s32.totalorder %s22, 0
      %p139 = por %p137, %p138
      %s140 = ssub.s32 %s23, %s35
      %p141 = scmp.eq.s32.totalorder %s140, 0
      %s143 = sadd.s32 %s142, 1
      %s144 = scalar_select %p141, %s142, %s143
      %p147 = pneg %p141
      %p148 = scmp.eq.s32.totalorder %s16, 1
      %p149 = por %p147, %p148
      %p150 = scmp.ne.s32.totalorder %s142, %s145
      %p151 = scmp.eq.s32.totalorder %s16, 0
      %p152 = por %p150, %p151
      %p153 = scmp.ne.s32.totalorder %s142, %s145
      %p154 = scmp.eq.s32.totalorder %s21, 1
      %p155 = por %p153, %p154
      %p156 = scmp.ne.s32.totalorder %s145, %s146
      %p157 = scmp.eq.s32.totalorder %s21, 0
      %p158 = por %p156, %p157
      %p159 = scmp.ne.s32.totalorder %s145, %s146
      %p160 = scmp.eq.s32.totalorder %s22, 1
      %p161 = por %p159, %p160
      %p163 = scmp.ne.s32.totalorder %s146, %s162
      %p164 = scmp.eq.s32.totalorder %s22, 0
      %p165 = por %p163, %p164
      %s167 = sadd.s32 %s166, 1
      %p170 = scmp.eq.s32.totalorder %s16, 1
      %p171 = scmp.ne.s32.totalorder %s166, %s168
      %p172 = scmp.eq.s32.totalorder %s16, 0
      %p173 = por %p171, %p172
      %p174 = scmp.ne.s32.totalorder %s166, %s168
      %p175 = scmp.eq.s32.totalorder %s21, 1
      %p176 = por %p174, %p175
      %p177 = scmp.ne.s32.totalorder %s168, %s169
      %p178 = scmp.eq.s32.totalorder %s21, 0
      %p179 = por %p177, %p178
      %p180 = scmp.ne.s32.totalorder %s168, %s169
      %p181 = scmp.eq.s32.totalorder %s22, 1
      %p182 = por %p180, %p181
      %p184 = scmp.ne.s32.totalorder %s169, %s183
      %p185 = scmp.eq.s32.totalorder %s22, 0
      %p186 = por %p184, %p185
      %s187 = ssub.s32 %s23, %s35
      %p188 = scmp.eq.s32.totalorder %s187, 0
      %s190 = sadd.s32 %s189, 1
      %s191 = scalar_select %p188, %s189, %s190
      %p194 = pneg %p188
      %p195 = scmp.eq.s32.totalorder %s16, 1
      %p196 = por %p194, %p195
      %p197 = scmp.ne.s32.totalorder %s189, %s192
      %p198 = scmp.eq.s32.totalorder %s16, 0
      %p199 = por %p197, %p198
      %p200 = scmp.ne.s32.totalorder %s189, %s192
      %p201 = scmp.eq.s32.totalorder %s21, 1
      %p202 = por %p200, %p201
      %p203 = scmp.ne.s32.totalorder %s192, %s193
      %p204 = scmp.eq.s32.totalorder %s21, 0
      %p205 = por %p203, %p204
      %p206 = scmp.ne.s32.totalorder %s192, %s193
      %p207 = scmp.eq.s32.totalorder %s22, 1
      %p208 = por %p206, %p207
      %p210 = scmp.ne.s32.totalorder %s193, %s209
      %p211 = scmp.eq.s32.totalorder %s22, 0
      %p212 = por %p210, %p211
      %p213 = scmp.le.s32.totalorder 1, %s16
      %p214 = scmp.lt.s32.totalorder %s16, 3
      %p215 = pnand %p213, %p214
      %p216 = pneg %p215
      // Predicated region
      $region9: #{tpu_custom_call.1} parent=5 // pred_check
        _
      $region10: #{tpu_custom_call.1} parent=5 // pred_check_branch
        %218 = sbr.rel (%p215) target = $region12
      $region11: #{tpu_custom_call.1} parent=5 // pred_region
        %s219 = ssub.s32 %s16, 1
        // Predicated region
        $region13: #{tpu_custom_call.1} parent=11 // pred_check
          %p220 = pneg %p106
        $region14: #{tpu_custom_call.1} parent=11 // pred_check_branch
          %222 = sbr.rel (%p220) target = $region16
        $region15: #{tpu_custom_call.1} parent=11 // pred_region
          %p223 = scmp.lt.s32.totalorder %s26, 0
          %s224 = scalar_select %p223, %s26, 0
          %s225 = smul.addr %s224, 2
          %s226 = scalar_lea.vmem %s2, %s225
        $region16: #{tpu_custom_call.1} parent=11 // pred_fallthru
          _
        // Predicated region
        $region17: #{tpu_custom_call.1} parent=11 // pred_check
          %p227 = pneg %p132
        $region18: #{tpu_custom_call.1} parent=11 // pred_check_branch
          %229 = sbr.rel (%p227) target = $region20
        $region19: #{tpu_custom_call.1} parent=11 // pred_region
          %p230 = scmp.lt.s32.totalorder %s26, 0
          %s231 = scalar_select %p230, %s26, 0
          %s232 = smul.addr %s231, 2
          %s233 = scalar_lea.vmem %s3, %s232
        $region20: #{tpu_custom_call.1} parent=11 // pred_fallthru
          _
        // Predicated region
        $region21: #{tpu_custom_call.1} parent=11 // pred_check
          %p234 = pneg %p179
        $region22: #{tpu_custom_call.1} parent=11 // pred_check_branch
          %236 = sbr.rel (%p234) target = $region24
        $region23: #{tpu_custom_call.1} parent=11 // pred_region
          %s238 = ssub.s32 16, 16
          %239 = vsyncadd [#allocation5], %s238
          %s241 = sshll.u32 %s5, 4
          %s242 = int_to_ptr.vmem [resolvable:$true] %s241
          %244 = dma.vmem_to_smem %s242, 16, [#allocation3], [#allocation5]
        $region24: #{tpu_custom_call.1} parent=11 // pred_fallthru
          _
      $region12: #{tpu_custom_call.1} parent=5 // pred_fallthru
        _
      %p245 = scmp.lt.s32.totalorder %s16, 2
      // Predicated region
      $region25: #{tpu_custom_call.1} parent=5 // pred_check
        %p246 = pneg %p245
      $region26: #{tpu_custom_call.1} parent=5 // pred_check_branch
        %248 = sbr.rel (%p246) target = $region28
      $region27: #{tpu_custom_call.1} parent=5 // pred_region
        // Predicated region
        $region29: #{tpu_custom_call.1} parent=27 // pred_check
          %p249 = pneg %p48
        $region30: #{tpu_custom_call.1} parent=27 // pred_check_branch
          %251 = sbr.rel (%p249) target = $region32
        $region31: #{tpu_custom_call.1} parent=27 // pred_region
          %s252 = smul.u32 4, %s23
          %p253 = scmp.lt.s32.totalorder %s252, 7
          %s254 = scalar_select %p253, %s252, 7
          %s255 = smul.addr %s254, 8
          %s256 = scalar_lea.vmem %s0, %s255
          %s257 = smul.u32 4, %s23
        $region32: #{tpu_custom_call.1} parent=27 // pred_fallthru
          _
        // Predicated region
        $region33: #{tpu_custom_call.1} parent=27 // pred_check
          %p258 = pneg %p74
        $region34: #{tpu_custom_call.1} parent=27 // pred_check_branch
          %260 = sbr.rel (%p258) target = $region36
        $region35: #{tpu_custom_call.1} parent=27 // pred_region
          %s261 = smul.u32 4, %s23
          %p262 = scmp.lt.s32.totalorder %s261, 7
          %s263 = scalar_select %p262, %s261, 7
          %s264 = smul.addr %s263, 8
          %s265 = scalar_lea.vmem %s1, %s264
          %s266 = smul.u32 4, %s23
        $region36: #{tpu_custom_call.1} parent=27 // pred_fallthru
          _
        // Predicated region
        $region37: #{tpu_custom_call.1} parent=27 // pred_check
          %p267 = pneg %p152
        $region38: #{tpu_custom_call.1} parent=27 // pred_check_branch
          %269 = sbr.rel (%p267) target = $region40
        $region39: #{tpu_custom_call.1} parent=27 // pred_region
          %s270 = sand.u32 %s142, 1
          %s271 = sand.u32 %s142, 1
          %s272 = smul.addr %s271, 48
          %s273 = scalar_lea.vmem [#allocation2], %s272
          %s274 = smul.addr %s23, 8
          %s275 = scalar_lea.vmem %s4, %s274
          // Predicated region
          $region41: #{tpu_custom_call.1} parent=39 // pred_check
            _
          $region42: #{tpu_custom_call.1} parent=39 // pred_check_branch
            %277 = sbr.rel (0) target = $region44
          $region43: #{tpu_custom_call.1} parent=39 // pred_region
            // Predicated region
            $region45: #{tpu_custom_call.1} parent=43 // pred_check
              _
            $region46: #{tpu_custom_call.1} parent=43 // pred_check_branch
              %279 = sbr.rel (0) target = $region48
            $region47: #{tpu_custom_call.1} parent=43 // pred_region
              // Predicated region
              $region60: #{tpu_custom_call.1} parent=47 // pred_check
                _
              $region61: #{tpu_custom_call.1} parent=47 // pred_check_branch
                %304 = sbr.rel (0) target = $region63
              $region62: #{tpu_custom_call.1} parent=47 // pred_region
                loop: start=0, step=1, limit=1
                $region64: #{tpu_custom_call.1} parent=62 // loop_pre_header
                  _
                $region65: #{tpu_custom_call.1} parent=62 // loop_header
                  %s306 = sphi 0, %s310
                  %p307 = scmp.ge.s32.totalorder %s306, 1
                  %s311 = sphi %s275, %s275
                  %s312 = sphi %s273, %s273
                $region66: #{tpu_custom_call.1} parent=62 // loop_header_branch
                  %309 = sbr.rel (%p307) target = $region70
                $region67: #{tpu_custom_call.1} parent=62 // loop_body
                  %v313 = vld [vmem:[%s311] sm:$0xff]
                  %314 = vst [vmem:[%s312] sm:$0xff] %v313
                  %v315 = vld [vmem:[%s311 + $0x10] sm:$0xff]
                  %316 = vst [vmem:[%s312 + $0x8] sm:$0xff] %v315
                  %v317 = vld [vmem:[%s311 + $0x20] sm:$0xff]
                  %318 = vst [vmem:[%s312 + $0x10] sm:$0xff] %v317
                  %v319 = vld [vmem:[%s311 + $0x30] sm:$0xff]
                  %320 = vst [vmem:[%s312 + $0x18] sm:$0xff] %v319
                  %v321 = vld [vmem:[%s311 + $0x40] sm:$0xff]
                  %322 = vst [vmem:[%s312 + $0x20] sm:$0xff] %v321
                  %v323 = vld [vmem:[%s311 + $0x50] sm:$0xff]
                  %324 = vst [vmem:[%s312 + $0x28] sm:$0xff] %v323
                $region68: #{tpu_custom_call.1} parent=62 // loop_footer
                  %s310 = sadd.s32 1, %s306
                $region69: #{tpu_custom_call.1} parent=62 // loop_footer_branch
                  %305 = sbr.rel target = $region65
                $region70: #{tpu_custom_call.1} parent=62 // loop_exit
                  _
              $region63: #{tpu_custom_call.1} parent=47 // pred_fallthru
                _
              // Predicated region
              $region71: #{tpu_custom_call.1} parent=47 // pred_check
                _
              $region72: #{tpu_custom_call.1} parent=47 // pred_check_branch
                %326 = sbr.rel target = $region74
              $region73: #{tpu_custom_call.1} parent=47 // pred_region
                _
              $region74: #{tpu_custom_call.1} parent=47 // pred_fallthru
                _
            $region48: #{tpu_custom_call.1} parent=43 // pred_fallthru
              _
            // Predicated region
            $region49: #{tpu_custom_call.1} parent=43 // pred_check
              _
            $region50: #{tpu_custom_call.1} parent=43 // pred_check_branch
              %281 = sbr.rel target = $region52
            $region51: #{tpu_custom_call.1} parent=43 // pred_region
              loop: start=0, step=1, limit=1
              $region53: #{tpu_custom_call.1} parent=51 // loop_pre_header
                _
              $region54: #{tpu_custom_call.1} parent=51 // loop_header
                %s284 = sphi 0, %s288
                %p285 = scmp.ge.s32.totalorder %s284, 1
                %s289 = sphi %s275, %s275
                %s290 = sphi %s273, %s273
              $region55: #{tpu_custom_call.1} parent=51 // loop_header_branch
                %287 = sbr.rel (%p285) target = $region59
              $region56: #{tpu_custom_call.1} parent=51 // loop_body
                %v291 = vld [vmem:[%s289] sm:$0xff]
                %292 = vst [vmem:[%s290] sm:$0xff] %v291
                %v293 = vld [vmem:[%s289 + $0x10] sm:$0xff]
                %294 = vst [vmem:[%s290 + $0x8] sm:$0xff] %v293
                %v295 = vld [vmem:[%s289 + $0x20] sm:$0xff]
                %296 = vst [vmem:[%s290 + $0x10] sm:$0xff] %v295
                %v297 = vld [vmem:[%s289 + $0x30] sm:$0xff]
                %298 = vst [vmem:[%s290 + $0x18] sm:$0xff] %v297
                %v299 = vld [vmem:[%s289 + $0x40] sm:$0xff]
                %300 = vst [vmem:[%s290 + $0x20] sm:$0xff] %v299
                %v301 = vld [vmem:[%s289 + $0x50] sm:$0xff]
                %302 = vst [vmem:[%s290 + $0x28] sm:$0xff] %v301
              $region57: #{tpu_custom_call.1} parent=51 // loop_footer
                %s288 = sadd.s32 1, %s284
              $region58: #{tpu_custom_call.1} parent=51 // loop_footer_branch
                %283 = sbr.rel target = $region54
              $region59: #{tpu_custom_call.1} parent=51 // loop_exit
                _
            $region52: #{tpu_custom_call.1} parent=43 // pred_fallthru
              _
          $region44: #{tpu_custom_call.1} parent=39 // pred_fallthru
            _
          %327 = vnop
        $region40: #{tpu_custom_call.1} parent=27 // pred_fallthru
          _
      $region28: #{tpu_custom_call.1} parent=5 // pred_fallthru
        _
      %p328 = scmp.le.s32.totalorder 1, %s16
      %p329 = scmp.lt.s32.totalorder %s16, 3
      %p330 = pnand %p328, %p329
      %p331 = pneg %p330
      // Predicated region
      $region75: #{tpu_custom_call.1} parent=5 // pred_check
        _
      $region76: #{tpu_custom_call.1} parent=5 // pred_check_branch
        %333 = sbr.rel (%p330) target = $region78
      $region77: #{tpu_custom_call.1} parent=5 // pred_region
        %s334 = ssub.s32 %s16, 1
        %s335 = sand.u32 %s145, 1
        %s336 = sand.u32 %s145, 1
        %s337 = smul.addr %s336, 48
        %s338 = scalar_lea.vmem [#allocation2], %s337
        // Predicated region
        $region79: #{tpu_custom_call.1} parent=77 // pred_check
          %p339 = pneg %p158
        $region80: #{tpu_custom_call.1} parent=77 // pred_check_branch
          %341 = sbr.rel (%p339) target = $region82
        $region81: #{tpu_custom_call.1} parent=77 // pred_region
          _
        $region82: #{tpu_custom_call.1} parent=77 // pred_fallthru
          _
        // Predicated region
        $region83: #{tpu_custom_call.1} parent=77 // pred_check
          %p342 = pneg %p179
        $region84: #{tpu_custom_call.1} parent=77 // pred_check_branch
          %344 = sbr.rel (%p342) target = $region86
        $region85: #{tpu_custom_call.1} parent=77 // pred_region
          %345 = dma.done [#allocation5], 16
        $region86: #{tpu_custom_call.1} parent=77 // pred_fallthru
          _
        %346 = sfence
        %s347 = smul.u32 4, %s25
        %p348 = scmp.lt.s32.totalorder %s347, 7
        %s349 = scalar_select %p348, %s347, 7
        %s350 = smul.addr %s349, 8
        %s351 = scalar_lea.vmem %s0, %s350
        %p352 = pneg %p54
        %p353 = pneg %p51
        %s354 = smul.u32 4, %s25
        %p355 = scmp.lt.s32.totalorder %s354, 7
        %s356 = scalar_select %p355, %s354, 7
        %s357 = smul.addr %s356, 8
        %s358 = scalar_lea.vmem %s1, %s357
        %p359 = pneg %p80
        %p360 = pneg %p77
        %p361 = scmp.lt.s32.totalorder %s26, 0
        %s362 = scalar_select %p361, %s26, 0
        %s363 = smul.addr %s362, 2
        %s364 = scalar_lea.vmem %s2, %s363
        %p365 = pneg %p106
        %p366 = pneg %p103
        %p367 = scmp.lt.s32.totalorder %s26, 0
        %s368 = scalar_select %p367, %s26, 0
        %s369 = smul.addr %s368, 2
        %s370 = scalar_lea.vmem %s3, %s369
        %p371 = pneg %p132
        %p372 = pneg %p129
        %s373 = sand.u32 %s145, 1
        %s374 = sand.u32 %s145, 1
        %s375 = smul.addr %s374, 48
        %s376 = scalar_lea.vmem [#allocation2], %s375
        %p377 = pneg %p158
        %p378 = pneg %p155
        %p379 = pneg %p179
        %p380 = pneg %p176
        %p381 = pneg %p205
        %p382 = pneg %p202
        %s383 = sand.u32 %s192, 1
        %s384 = scalar_lea.sflag [#allocation4], %s383
        %s385 = sand.u32 %s192, 1
        %s386 = smul.addr %s385, 32
        %s387 = scalar_lea.vmem [#allocation6], %s386
        %s388 = smul.u32 4, %s25
        %p389 = scmp.lt.s32.totalorder %s388, 7
        %s390 = scalar_select %p389, %s388, 7
        %s391 = smul.addr %s390, 8
        %s392 = scalar_lea.vmem %s0, %s391
        %s393 = smul.u32 4, %s25
        %s394 = smul.u32 4, %s25
        %p395 = scmp.lt.s32.totalorder %s394, 7
        %s396 = scalar_select %p395, %s394, 7
        %s397 = smul.addr %s396, 8
        %s398 = scalar_lea.vmem %s1, %s397
        %s399 = smul.u32 4, %s25
        %p400 = scmp.lt.s32.totalorder %s26, 0
        %s401 = scalar_select %p400, %s26, 0
        %s402 = smul.addr %s401, 2
        %s403 = scalar_lea.vmem %s2, %s402
        %p404 = scmp.lt.s32.totalorder %s26, 0
        %s405 = scalar_select %p404, %s26, 0
        %s406 = smul.addr %s405, 2
        %s407 = scalar_lea.vmem %s3, %s406
        %s408 = sld [smem:[#allocation3]]
        %s409 = sld [smem:[#allocation3 + $0x1]]
        %s410 = sld [smem:[#allocation3 + $0x2]]
        %p411 = scmp.eq.s32.totalorder %s26, 0
        // Predicated region
        $region87: #{tpu_custom_call.1} parent=77 // pred_check
          %p412 = pneg %p411
        $region88: #{tpu_custom_call.1} parent=77 // pred_check_branch
          %414 = sbr.rel (%p412) target = $region90
        $region89: #{tpu_custom_call.1} parent=77 // pred_region
          %s415 = scalar_lea.vmem %s338, 40 [#allocation2]
          %v416 = vld [vmem:[%s415] sm:$0xff]
          %v417 = vld [vmem:[%s338] sm:$0xff]
          %s418 = scalar_lea.vmem %s338, 16 [#allocation2]
          %v419 = vld [vmem:[%s418] sm:$0xff]
          %v420 = vmul.f32 %v419, %v416
          %v421 = vadd.f32 %v417, %v420
          %s422 = scalar_lea.vmem %s338, 8 [#allocation2]
          %v423 = vld [vmem:[%s422] sm:$0xff]
          %s424 = scalar_lea.vmem %s338, 24 [#allocation2]
          %v425 = vld [vmem:[%s424] sm:$0xff]
          %v426 = vmul.f32 %v425, %v416
          %v427 = vadd.f32 %v423, %v426
          %v428 = vmul.f32 %v421, %v421
          %v429 = vmul.f32 %v427, %v427
          %v430 = vadd.f32 %v428, %v429
          %v431 = vstv %s408
          %v432 = vsub.f32 %v431, %v430
          %s433 = scalar_lea.vmem %s338, 32 [#allocation2]
          %v434 = vld [vmem:[%s433] sm:$0xff]
          %v435 = vmul.f32 %v432, %v434
          %v436 = vrot.slane %v435, 4
          %v437 = vadd.f32 %v435, %v436
          %v438 = vrot.slane %v437, 2
          %v439 = vadd.f32 %v437, %v438
          %v440 = vrot.slane %v439, 1
          %v441 = vadd.f32 %v439, %v440
          %v442 = vlaneseq
          %v443 = vshrl.u32 %v442, 7
          %v444 = vadd.s32 %v443, 8
          %v445 = vadd.s32 %v443, 16
          %v446 = vadd.s32 %v443, 24
          %vm447 = vcmp.eq.s32.totalorder %v443, 0
          %vm448 = vcmp.eq.s32.totalorder %v444, 0
          %vm449 = vcmp.eq.s32.totalorder %v445, 0
          %vm450 = vcmp.eq.s32.totalorder %v446, 0
          %v451 = vsub.f32 0.0, %v441
          %v452 = vsel %vm447, %v451, 0.0
          %v453 = vsel %vm448, %v451, 0.0
          %v454 = vsel %vm449, %v451, 0.0
          %v455 = vsel %vm450, %v451, 0.0
          %456 = vst [vmem:[%s387] sm:$0xff] %v452
          %457 = vst [vmem:[%s387 + $0x8] sm:$0xff] %v453
          %458 = vst [vmem:[%s387 + $0x10] sm:$0xff] %v454
          %459 = vst [vmem:[%s387 + $0x18] sm:$0xff] %v455
        $region90: #{tpu_custom_call.1} parent=77 // pred_fallthru
          _
        %s460 = smul.u32 %s25, 32
        %s461 = smul.u32 %s26, 128
        %s462 = sadd.s32 %s460, 32
        %p463 = scmp.ge.s32.totalorder %s461, %s462
        %s464 = sadd.s32 %s461, 128
        %p465 = scmp.le.s32.totalorder %s464, 64
        %p466 = pnand %p463, %p465
        %p467 = pneg %p466
        %s468 = sadd.s32 %s461, 127
        %p469 = scmp.gt.s32.totalorder %s468, %s460
        // Predicated region
        $region91: #{tpu_custom_call.1} parent=77 // pred_check
          _
        $region92: #{tpu_custom_call.1} parent=77 // pred_check_branch
          %471 = sbr.rel (%p466) target = $region94
        $region93: #{tpu_custom_call.1} parent=77 // pred_region
          %v472 = vld [vmem:[%s392] sm:$0xff]
          %v473 = vld [vmem:[%s392 + $0x8] sm:$0xff]
          %v474 = vld [vmem:[%s392 + $0x10] sm:$0xff]
          %v475 = vld [vmem:[%s392 + $0x18] sm:$0xff]
          %v476 = vld [vmem:[%s403] sm:$0x1]
          %478 = vset.pattern.permute.xlu0 0
          %479 = vperm.xlu0 %478, %v472
          %v480 = vpop.permute.xlu0 %479
          %483 = vset.pattern.permute.xlu0 0
          %484 = vperm.xlu0 %483, %v473
          %v485 = vpop.permute.xlu0 %484
          %488 = vset.pattern.permute.xlu0 0
          %489 = vperm.xlu0 %488, %v474
          %v490 = vpop.permute.xlu0 %489
          %493 = vset.pattern.permute.xlu0 0
          %494 = vperm.xlu0 %493, %v475
          %v495 = vpop.permute.xlu0 %494
          %v497 = vlaneseq
          %v498 = vshrl.u32 %v497, 7
          %v499 = vsub.s32 0, %v498
          %v500 = vrot.slane %v476, %v499
          %v501 = vsub.f32 %v480, %v500
          %v502 = vsub.f32 %v485, %v500
          %v503 = vsub.f32 %v490, %v500
          %v504 = vsub.f32 %v495, %v500
          %v505 = vld [vmem:[%s403 + $0x1] sm:$0x1]
          %506 = vset.pattern.permute.xlu0 1
          %507 = vperm.xlu0 %506, %v472
          %v508 = vpop.permute.xlu0 %507
          %510 = vset.pattern.permute.xlu0 1
          %511 = vperm.xlu0 %510, %v473
          %v512 = vpop.permute.xlu0 %511
          %514 = vset.pattern.permute.xlu0 1
          %515 = vperm.xlu0 %514, %v474
          %v516 = vpop.permute.xlu0 %515
          %518 = vset.pattern.permute.xlu0 1
          %519 = vperm.xlu0 %518, %v475
          %v520 = vpop.permute.xlu0 %519
          %v522 = vlaneseq
          %v523 = vshrl.u32 %v522, 7
          %v524 = vsub.s32 0, %v523
          %v525 = vrot.slane %v505, %v524
          %v526 = vsub.f32 %v508, %v525
          %v527 = vsub.f32 %v512, %v525
          %v528 = vsub.f32 %v516, %v525
          %v529 = vsub.f32 %v520, %v525
          %v530 = vld [vmem:[%s398] sm:$0xff]
          %v531 = vld [vmem:[%s398 + $0x8] sm:$0xff]
          %v532 = vld [vmem:[%s398 + $0x10] sm:$0xff]
          %v533 = vld [vmem:[%s398 + $0x18] sm:$0xff]
          %v534 = vld [vmem:[%s407] sm:$0x1]
          %536 = vset.pattern.permute.xlu0 0
          %537 = vperm.xlu0 %536, %v530
          %v538 = vpop.permute.xlu0 %537
          %541 = vset.pattern.permute.xlu0 0
          %542 = vperm.xlu0 %541, %v531
          %v543 = vpop.permute.xlu0 %542
          %546 = vset.pattern.permute.xlu0 0
          %547 = vperm.xlu0 %546, %v532
          %v548 = vpop.permute.xlu0 %547
          %551 = vset.pattern.permute.xlu0 0
          %552 = vperm.xlu0 %551, %v533
          %v553 = vpop.permute.xlu0 %552
          %v555 = vlaneseq
          %v556 = vshrl.u32 %v555, 7
          %v557 = vsub.s32 0, %v556
          %v558 = vrot.slane %v534, %v557
          %v559 = vsub.f32 %v538, %v558
          %v560 = vsub.f32 %v543, %v558
          %v561 = vsub.f32 %v548, %v558
          %v562 = vsub.f32 %v553, %v558
          %v563 = vld [vmem:[%s407 + $0x1] sm:$0x1]
          %564 = vset.pattern.permute.xlu0 1
          %565 = vperm.xlu0 %564, %v530
          %v566 = vpop.permute.xlu0 %565
          %568 = vset.pattern.permute.xlu0 1
          %569 = vperm.xlu0 %568, %v531
          %v570 = vpop.permute.xlu0 %569
          %572 = vset.pattern.permute.xlu0 1
          %573 = vperm.xlu0 %572, %v532
          %v574 = vpop.permute.xlu0 %573
          %576 = vset.pattern.permute.xlu0 1
          %577 = vperm.xlu0 %576, %v533
          %v578 = vpop.permute.xlu0 %577
          %v580 = vlaneseq
          %v581 = vshrl.u32 %v580, 7
          %v582 = vsub.s32 0, %v581
          %v583 = vrot.slane %v563, %v582
          %v584 = vsub.f32 %v566, %v583
          %v585 = vsub.f32 %v570, %v583
          %v586 = vsub.f32 %v574, %v583
          %v587 = vsub.f32 %v578, %v583
          %v588 = vmul.f32 %v501, %v501
          %v589 = vmul.f32 %v502, %v502
          %v590 = vmul.f32 %v503, %v503
          %v591 = vmul.f32 %v504, %v504
          %v592 = vmul.f32 %v526, %v526
          %v593 = vmul.f32 %v527, %v527
          %v594 = vmul.f32 %v528, %v528
          %v595 = vmul.f32 %v529, %v529
          %v596 = vadd.f32 %v588, %v592
          %v597 = vadd.f32 %v589, %v593
          %v598 = vadd.f32 %v590, %v594
          %v599 = vadd.f32 %v591, %v595
          %v600 = vmul.f32 %v501, %v559
          %v601 = vmul.f32 %v502, %v560
          %v602 = vmul.f32 %v503, %v561
          %v603 = vmul.f32 %v504, %v562
          %v604 = vmul.f32 %v526, %v584
          %v605 = vmul.f32 %v527, %v585
          %v606 = vmul.f32 %v528, %v586
          %v607 = vmul.f32 %v529, %v587
          %v608 = vadd.f32 %v600, %v604
          %v609 = vadd.f32 %v601, %v605
          %v610 = vadd.f32 %v602, %v606
          %v611 = vadd.f32 %v603, %v607
          %v612 = vmul.f32 %v559, %v559
          %v613 = vmul.f32 %v560, %v560
          %v614 = vmul.f32 %v561, %v561
          %v615 = vmul.f32 %v562, %v562
          %v616 = vmul.f32 %v584, %v584
          %v617 = vmul.f32 %v585, %v585
          %v618 = vmul.f32 %v586, %v586
          %v619 = vmul.f32 %v587, %v587
          %v620 = vadd.f32 %v612, %v616
          %v621 = vadd.f32 %v613, %v617
          %v622 = vadd.f32 %v614, %v618
          %v623 = vadd.f32 %v615, %v619
          %v624 = vmax.f32 %v620, 1e-12
          %v625 = vmax.f32 %v621, 1e-12
          %v626 = vmax.f32 %v622, 1e-12
          %v627 = vmax.f32 %v623, 1e-12
          %v628 = vrsqrt.pop %v624
          %v629 = vrsqrt.pop %v625
          %v630 = vrsqrt.pop %v626
          %v631 = vrsqrt.pop %v627
          %v632 = vmul.f32 %v624, %v628
          %v633 = vmul.f32 %v625, %v629
          %v634 = vmul.f32 %v626, %v630
          %v635 = vmul.f32 %v627, %v631
          %v636 = vmul.f32 %v608, %v628
          %v637 = vmul.f32 %v609, %v629
          %v638 = vmul.f32 %v610, %v630
          %v639 = vmul.f32 %v611, %v631
          %v640 = vstv %s408
          %v641 = vsub.f32 %v640, %v596
          %v642 = vsub.f32 %v640, %v597
          %v643 = vsub.f32 %v640, %v598
          %v644 = vsub.f32 %v640, %v599
          %v645 = vmul.f32 %v636, %v636
          %v646 = vmul.f32 %v637, %v637
          %v647 = vmul.f32 %v638, %v638
          %v648 = vmul.f32 %v639, %v639
          %v649 = vadd.f32 %v641, %v645
          %v650 = vadd.f32 %v642, %v646
          %v651 = vadd.f32 %v643, %v647
          %v652 = vadd.f32 %v644, %v648
          %v653 = vmul.f32 %v649, 1.442695
          %v654 = vpow.pop %v653
          %v655 = vmul.f32 %v650, 1.442695
          %v656 = vpow.pop %v655
          %v657 = vmul.f32 %v651, 1.442695
          %v658 = vpow.pop %v657
          %v659 = vmul.f32 %v652, 1.442695
          %v660 = vpow.pop %v659
          %v661 = vmul.f32 %v628, 0.88622695
          %v662 = vmul.f32 %v629, 0.88622695
          %v663 = vmul.f32 %v630, 0.88622695
          %v664 = vmul.f32 %v631, 0.88622695
          %v665 = vmul.f32 %v654, %v661
          %v666 = vmul.f32 %v656, %v662
          %v667 = vmul.f32 %v658, %v663
          %v668 = vmul.f32 %v660, %v664
          %v669 = vstv %s410
          %v670 = vmul.f32 %v632, %v669
          %v671 = vmul.f32 %v633, %v669
          %v672 = vmul.f32 %v634, %v669
          %v673 = vmul.f32 %v635, %v669
          %v674 = vadd.f32 %v670, %v636
          %v675 = vadd.f32 %v671, %v637
          %v676 = vadd.f32 %v672, %v638
          %v677 = vadd.f32 %v673, %v639
          %v678 = vmul.f32 %v674, %v674
          %v679 = vmul.f32 %v675, %v675
          %v680 = vmul.f32 %v676, %v676
          %v681 = vmul.f32 %v677, %v677
          %v682 = vmul.f32 %v678, 0.100911304
          %v683 = vmul.f32 %v679, 0.100911304
          %v684 = vmul.f32 %v680, 0.100911304
          %v685 = vmul.f32 %v681, 0.100911304
          %v686 = vadd.f32 %v682, 1.1283792
          %v687 = vadd.f32 %v683, 1.1283792
          %v688 = vadd.f32 %v684, 1.1283792
          %v689 = vadd.f32 %v685, 1.1283792
          %v690 = vmul.f32 %v674, %v686
          %v691 = vmul.f32 %v675, %v687
          %v692 = vmul.f32 %v676, %v688
          %v693 = vmul.f32 %v677, %v689
          %v694 = vtanh.pop %v690
          %v695 = vtanh.pop %v691
          %v696 = vtanh.pop %v692
          %v697 = vtanh.pop %v693
          %v698 = vstv %s409
          %v699 = vmul.f32 %v632, %v698
          %v700 = vmul.f32 %v633, %v698
          %v701 = vmul.f32 %v634, %v698
          %v702 = vmul.f32 %v635, %v698
          %v703 = vadd.f32 %v699, %v636
          %v704 = vadd.f32 %v700, %v637
          %v705 = vadd.f32 %v701, %v638
          %v706 = vadd.f32 %v702, %v639
          %v707 = vmul.f32 %v703, %v703
          %v708 = vmul.f32 %v704, %v704
          %v709 = vmul.f32 %v705, %v705
          %v710 = vmul.f32 %v706, %v706
          %v711 = vmul.f32 %v707, 0.100911304
          %v712 = vmul.f32 %v708, 0.100911304
          %v713 = vmul.f32 %v709, 0.100911304
          %v714 = vmul.f32 %v710, 0.100911304
          %v715 = vadd.f32 %v711, 1.1283792
          %v716 = vadd.f32 %v712, 1.1283792
          %v717 = vadd.f32 %v713, 1.1283792
          %v718 = vadd.f32 %v714, 1.1283792
          %v719 = vmul.f32 %v703, %v715
          %v720 = vmul.f32 %v704, %v716
          %v721 = vmul.f32 %v705, %v717
          %v722 = vmul.f32 %v706, %v718
          %v723 = vtanh.pop %v719
          %v724 = vtanh.pop %v720
          %v725 = vtanh.pop %v721
          %v726 = vtanh.pop %v722
          %v727 = vsub.f32 %v694, %v723
          %v728 = vsub.f32 %v695, %v724
          %v729 = vsub.f32 %v696, %v725
          %v730 = vsub.f32 %v697, %v726
          %v731 = vmul.f32 %v665, %v727
          %v732 = vmul.f32 %v666, %v728
          %v733 = vmul.f32 %v667, %v729
          %v734 = vmul.f32 %v668, %v730
          %v735 = vld [vmem:[%s387] sm:$0xff]
          %v736 = vld [vmem:[%s387 + $0x8] sm:$0xff]
          %v737 = vld [vmem:[%s387 + $0x10] sm:$0xff]
          %v738 = vld [vmem:[%s387 + $0x18] sm:$0xff]
          %v739 = vadd.f32 %v735, %v731
          %v740 = vadd.f32 %v736, %v732
          %v741 = vadd.f32 %v737, %v733
          %v742 = vadd.f32 %v738, %v734
          %743 = vst [vmem:[%s387] sm:$0xff] %v739
          %744 = vst [vmem:[%s387 + $0x8] sm:$0xff] %v740
          %745 = vst [vmem:[%s387 + $0x10] sm:$0xff] %v741
          %746 = vst [vmem:[%s387 + $0x18] sm:$0xff] %v742
        $region94: #{tpu_custom_call.1} parent=77 // pred_fallthru
          _
        %p747 = pneg %p467
        %p748 = pnand %p469, %p747
        %p749 = pneg %p748
        // Predicated region
        $region95: #{tpu_custom_call.1} parent=77 // pred_check
          _
        $region96: #{tpu_custom_call.1} parent=77 // pred_check_branch
          %751 = sbr.rel (%p748) target = $region98
        $region97: #{tpu_custom_call.1} parent=77 // pred_region
          %v752 = vld [vmem:[%s392] sm:$0xff]
          %v753 = vld [vmem:[%s392 + $0x8] sm:$0xff]
          %v754 = vld [vmem:[%s392 + $0x10] sm:$0xff]
          %v755 = vld [vmem:[%s392 + $0x18] sm:$0xff]
          %v756 = vld [vmem:[%s403] sm:$0x1]
          %758 = vset.pattern.permute.xlu0 0
          %759 = vperm.xlu0 %758, %v752
          %v760 = vpop.permute.xlu0 %759
          %763 = vset.pattern.permute.xlu0 0
          %764 = vperm.xlu0 %763, %v753
          %v765 = vpop.permute.xlu0 %764
          %768 = vset.pattern.permute.xlu0 0
          %769 = vperm.xlu0 %768, %v754
          %v770 = vpop.permute.xlu0 %769
          %773 = vset.pattern.permute.xlu0 0
          %774 = vperm.xlu0 %773, %v755
          %v775 = vpop.permute.xlu0 %774
          %v777 = vlaneseq
          %v778 = vshrl.u32 %v777, 7
          %v779 = vsub.s32 0, %v778
          %v780 = vrot.slane %v756, %v779
          %v781 = vsub.f32 %v760, %v780
          %v782 = vsub.f32 %v765, %v780
          %v783 = vsub.f32 %v770, %v780
          %v784 = vsub.f32 %v775, %v780
          %v785 = vld [vmem:[%s403 + $0x1] sm:$0x1]
          %786 = vset.pattern.permute.xlu0 1
          %787 = vperm.xlu0 %786, %v752
          %v788 = vpop.permute.xlu0 %787
          %790 = vset.pattern.permute.xlu0 1
          %791 = vperm.xlu0 %790, %v753
          %v792 = vpop.permute.xlu0 %791
          %794 = vset.pattern.permute.xlu0 1
          %795 = vperm.xlu0 %794, %v754
          %v796 = vpop.permute.xlu0 %795
          %798 = vset.pattern.permute.xlu0 1
          %799 = vperm.xlu0 %798, %v755
          %v800 = vpop.permute.xlu0 %799
          %v802 = vlaneseq
          %v803 = vshrl.u32 %v802, 7
          %v804 = vsub.s32 0, %v803
          %v805 = vrot.slane %v785, %v804
          %v806 = vsub.f32 %v788, %v805
          %v807 = vsub.f32 %v792, %v805
          %v808 = vsub.f32 %v796, %v805
          %v809 = vsub.f32 %v800, %v805
          %v810 = vld [vmem:[%s398] sm:$0xff]
          %v811 = vld [vmem:[%s398 + $0x8] sm:$0xff]
          %v812 = vld [vmem:[%s398 + $0x10] sm:$0xff]
          %v813 = vld [vmem:[%s398 + $0x18] sm:$0xff]
          %v814 = vld [vmem:[%s407] sm:$0x1]
          %816 = vset.pattern.permute.xlu0 0
          %817 = vperm.xlu0 %816, %v810
          %v818 = vpop.permute.xlu0 %817
          %821 = vset.pattern.permute.xlu0 0
          %822 = vperm.xlu0 %821, %v811
          %v823 = vpop.permute.xlu0 %822
          %826 = vset.pattern.permute.xlu0 0
          %827 = vperm.xlu0 %826, %v812
          %v828 = vpop.permute.xlu0 %827
          %831 = vset.pattern.permute.xlu0 0
          %832 = vperm.xlu0 %831, %v813
          %v833 = vpop.permute.xlu0 %832
          %v835 = vlaneseq
          %v836 = vshrl.u32 %v835, 7
          %v837 = vsub.s32 0, %v836
          %v838 = vrot.slane %v814, %v837
          %v839 = vsub.f32 %v818, %v838
          %v840 = vsub.f32 %v823, %v838
          %v841 = vsub.f32 %v828, %v838
          %v842 = vsub.f32 %v833, %v838
          %v843 = vld [vmem:[%s407 + $0x1] sm:$0x1]
          %844 = vset.pattern.permute.xlu0 1
          %845 = vperm.xlu0 %844, %v810
          %v846 = vpop.permute.xlu0 %845
          %848 = vset.pattern.permute.xlu0 1
          %849 = vperm.xlu0 %848, %v811
          %v850 = vpop.permute.xlu0 %849
          %852 = vset.pattern.permute.xlu0 1
          %853 = vperm.xlu0 %852, %v812
          %v854 = vpop.permute.xlu0 %853
          %856 = vset.pattern.permute.xlu0 1
          %857 = vperm.xlu0 %856, %v813
          %v858 = vpop.permute.xlu0 %857
          %v860 = vlaneseq
          %v861 = vshrl.u32 %v860, 7
          %v862 = vsub.s32 0, %v861
          %v863 = vrot.slane %v843, %v862
          %v864 = vsub.f32 %v846, %v863
          %v865 = vsub.f32 %v850, %v863
          %v866 = vsub.f32 %v854, %v863
          %v867 = vsub.f32 %v858, %v863
          %v868 = vmul.f32 %v781, %v781
          %v869 = vmul.f32 %v782, %v782
          %v870 = vmul.f32 %v783, %v783
          %v871 = vmul.f32 %v784, %v784
          %v872 = vmul.f32 %v806, %v806
          %v873 = vmul.f32 %v807, %v807
          %v874 = vmul.f32 %v808, %v808
          %v875 = vmul.f32 %v809, %v809
          %v876 = vadd.f32 %v868, %v872
          %v877 = vadd.f32 %v869, %v873
          %v878 = vadd.f32 %v870, %v874
          %v879 = vadd.f32 %v871, %v875
          %v880 = vmul.f32 %v781, %v839
          %v881 = vmul.f32 %v782, %v840
          %v882 = vmul.f32 %v783, %v841
          %v883 = vmul.f32 %v784, %v842
          %v884 = vmul.f32 %v806, %v864
          %v885 = vmul.f32 %v807, %v865
          %v886 = vmul.f32 %v808, %v866
          %v887 = vmul.f32 %v809, %v867
          %v888 = vadd.f32 %v880, %v884
          %v889 = vadd.f32 %v881, %v885
          %v890 = vadd.f32 %v882, %v886
          %v891 = vadd.f32 %v883, %v887
          %v892 = vmul.f32 %v839, %v839
          %v893 = vmul.f32 %v840, %v840
          %v894 = vmul.f32 %v841, %v841
          %v895 = vmul.f32 %v842, %v842
          %v896 = vmul.f32 %v864, %v864
          %v897 = vmul.f32 %v865, %v865
          %v898 = vmul.f32 %v866, %v866
          %v899 = vmul.f32 %v867, %v867
          %v900 = vadd.f32 %v892, %v896
          %v901 = vadd.f32 %v893, %v897
          %v902 = vadd.f32 %v894, %v898
          %v903 = vadd.f32 %v895, %v899
          %v904 = vmax.f32 %v900, 1e-12
          %v905 = vmax.f32 %v901, 1e-12
          %v906 = vmax.f32 %v902, 1e-12
          %v907 = vmax.f32 %v903, 1e-12
          %v908 = vrsqrt.pop %v904
          %v909 = vrsqrt.pop %v905
          %v910 = vrsqrt.pop %v906
          %v911 = vrsqrt.pop %v907
          %v912 = vmul.f32 %v904, %v908
          %v913 = vmul.f32 %v905, %v909
          %v914 = vmul.f32 %v906, %v910
          %v915 = vmul.f32 %v907, %v911
          %v916 = vmul.f32 %v888, %v908
          %v917 = vmul.f32 %v889, %v909
          %v918 = vmul.f32 %v890, %v910
          %v919 = vmul.f32 %v891, %v911
          %v920 = vstv %s408
          %v921 = vsub.f32 %v920, %v876
          %v922 = vsub.f32 %v920, %v877
          %v923 = vsub.f32 %v920, %v878
          %v924 = vsub.f32 %v920, %v879
          %v925 = vmul.f32 %v916, %v916
          %v926 = vmul.f32 %v917, %v917
          %v927 = vmul.f32 %v918, %v918
          %v928 = vmul.f32 %v919, %v919
          %v929 = vadd.f32 %v921, %v925
          %v930 = vadd.f32 %v922, %v926
          %v931 = vadd.f32 %v923, %v927
          %v932 = vadd.f32 %v924, %v928
          %v933 = vmul.f32 %v929, 1.442695
          %v934 = vpow.pop %v933
          %v935 = vmul.f32 %v930, 1.442695
          %v936 = vpow.pop %v935
          %v937 = vmul.f32 %v931, 1.442695
          %v938 = vpow.pop %v937
          %v939 = vmul.f32 %v932, 1.442695
          %v940 = vpow.pop %v939
          %v941 = vmul.f32 %v908, 0.88622695
          %v942 = vmul.f32 %v909, 0.88622695
          %v943 = vmul.f32 %v910, 0.88622695
          %v944 = vmul.f32 %v911, 0.88622695
          %v945 = vmul.f32 %v934, %v941
          %v946 = vmul.f32 %v936, %v942
          %v947 = vmul.f32 %v938, %v943
          %v948 = vmul.f32 %v940, %v944
          %v949 = vstv %s410
          %v950 = vmul.f32 %v912, %v949
          %v951 = vmul.f32 %v913, %v949
          %v952 = vmul.f32 %v914, %v949
          %v953 = vmul.f32 %v915, %v949
          %v954 = vadd.f32 %v950, %v916
          %v955 = vadd.f32 %v951, %v917
          %v956 = vadd.f32 %v952, %v918
          %v957 = vadd.f32 %v953, %v919
          %v958 = vmul.f32 %v954, %v954
          %v959 = vmul.f32 %v955, %v955
          %v960 = vmul.f32 %v956, %v956
          %v961 = vmul.f32 %v957, %v957
          %v962 = vmul.f32 %v958, 0.100911304
          %v963 = vmul.f32 %v959, 0.100911304
          %v964 = vmul.f32 %v960, 0.100911304
          %v965 = vmul.f32 %v961, 0.100911304
          %v966 = vadd.f32 %v962, 1.1283792
          %v967 = vadd.f32 %v963, 1.1283792
          %v968 = vadd.f32 %v964, 1.1283792
          %v969 = vadd.f32 %v965, 1.1283792
          %v970 = vmul.f32 %v954, %v966
          %v971 = vmul.f32 %v955, %v967
          %v972 = vmul.f32 %v956, %v968
          %v973 = vmul.f32 %v957, %v969
          %v974 = vtanh.pop %v970
          %v975 = vtanh.pop %v971
          %v976 = vtanh.pop %v972
          %v977 = vtanh.pop %v973
          %v978 = vstv %s409
          %v979 = vmul.f32 %v912, %v978
          %v980 = vmul.f32 %v913, %v978
          %v981 = vmul.f32 %v914, %v978
          %v982 = vmul.f32 %v915, %v978
          %v983 = vadd.f32 %v979, %v916
          %v984 = vadd.f32 %v980, %v917
          %v985 = vadd.f32 %v981, %v918
          %v986 = vadd.f32 %v982, %v919
          %v987 = vmul.f32 %v983, %v983
          %v988 = vmul.f32 %v984, %v984
          %v989 = vmul.f32 %v985, %v985
          %v990 = vmul.f32 %v986, %v986
          %v991 = vmul.f32 %v987, 0.100911304
          %v992 = vmul.f32 %v988, 0.100911304
          %v993 = vmul.f32 %v989, 0.100911304
          %v994 = vmul.f32 %v990, 0.100911304
          %v995 = vadd.f32 %v991, 1.1283792
          %v996 = vadd.f32 %v992, 1.1283792
          %v997 = vadd.f32 %v993, 1.1283792
          %v998 = vadd.f32 %v994, 1.1283792
          %v999 = vmul.f32 %v983, %v995
          %v1000 = vmul.f32 %v984, %v996
          %v1001 = vmul.f32 %v985, %v997
          %v1002 = vmul.f32 %v986, %v998
          %v1003 = vtanh.pop %v999
          %v1004 = vtanh.pop %v1000
          %v1005 = vtanh.pop %v1001
          %v1006 = vtanh.pop %v1002
          %v1007 = vsub.f32 %v974, %v1003
          %v1008 = vsub.f32 %v975, %v1004
          %v1009 = vsub.f32 %v976, %v1005
          %v1010 = vsub.f32 %v977, %v1006
          %v1011 = vmul.f32 %v945, %v1007
          %v1012 = vmul.f32 %v946, %v1008
          %v1013 = vmul.f32 %v947, %v1009
          %v1014 = vmul.f32 %v948, %v1010
          %v1015 = vlaneseq
          %v1016 = vshrl.u32 %v1015, 7
          %v1017 = vadd.s32 %v1016, 8
          %v1018 = vadd.s32 %v1016, 16
          %v1019 = vadd.s32 %v1016, 24
          %v1020 = vlaneseq
          %v1021 = vand.u32 %v1020, 127
          %v1022 = vsub.s32 %v1021, %v1016
          %v1023 = vsub.s32 %v1021, %v1017
          %v1024 = vsub.s32 %v1021, %v1018
          %v1025 = vsub.s32 %v1021, %v1019
          %s1026 = ssub.s32 %s460, %s461
          %v1027 = vstv %s1026
          %vm1028 = vcmp.gt.s32.totalorder %v1022, %v1027
          %vm1029 = vcmp.gt.s32.totalorder %v1023, %v1027
          %vm1030 = vcmp.gt.s32.totalorder %v1024, %v1027
          %vm1031 = vcmp.gt.s32.totalorder %v1025, %v1027
          %s1032 = ssub.s32 64, %s461
          %v1033 = vstv %s1032
          %vm1034 = vcmp.lt.s32.totalorder %v1021, %v1033
          %vm1035 = vmand %vm1028, %vm1034
          %vm1036 = vmand %vm1029, %vm1034
          %vm1037 = vmand %vm1030, %vm1034
          %vm1038 = vmand %vm1031, %vm1034
          %v1039 = vsel %vm1035, %v1011, 0.0
          %v1040 = vsel %vm1036, %v1012, 0.0
          %v1041 = vsel %vm1037, %v1013, 0.0
          %v1042 = vsel %vm1038, %v1014, 0.0
          %v1043 = vld [vmem:[%s387] sm:$0xff]
          %v1044 = vld [vmem:[%s387 + $0x8] sm:$0xff]
          %v1045 = vld [vmem:[%s387 + $0x10] sm:$0xff]
          %v1046 = vld [vmem:[%s387 + $0x18] sm:$0xff]
          %v1047 = vadd.f32 %v1043, %v1039
          %v1048 = vadd.f32 %v1044, %v1040
          %v1049 = vadd.f32 %v1045, %v1041
          %v1050 = vadd.f32 %v1046, %v1042
          %1051 = vst [vmem:[%s387] sm:$0xff] %v1047
          %1052 = vst [vmem:[%s387 + $0x8] sm:$0xff] %v1048
          %1053 = vst [vmem:[%s387 + $0x10] sm:$0xff] %v1049
          %1054 = vst [vmem:[%s387 + $0x18] sm:$0xff] %v1050
        $region98: #{tpu_custom_call.1} parent=77 // pred_fallthru
          _
        %s1055 = sand.u32 %s192, 1
        %s1056 = scalar_lea.sflag [#allocation4], %s1055
        %s1057 = sand.u32 %s192, 1
        %s1058 = smul.addr %s1057, 32
        %s1059 = scalar_lea.vmem [#allocation6], %s1058
        // Predicated region
        $region99: #{tpu_custom_call.1} parent=77 // pred_check
          %p1060 = pneg %p202
        $region100: #{tpu_custom_call.1} parent=77 // pred_check_branch
          %1062 = sbr.rel (%p1060) target = $region102
        $region101: #{tpu_custom_call.1} parent=77 // pred_region
          %s1064 = ssub.s32 512, 512
          %1065 = vsyncadd %s1056, %s1064
          %s1066 = smul.addr %s25, 4
          %s1067 = smul.addr %s1066, 128
          %s1068 = scalar_lea.hbm %s6, %s1067
          %s1069 = sshll.u32 %s1059, 4
          %s1070 = int_to_ptr.vmem [resolvable:$true] %s1069
          %1075 = dma.vmem_to_hbm [thread:$0]  %s1070, 512, %s1068, %s1056, 128, 128, 8
        $region102: #{tpu_custom_call.1} parent=77 // pred_fallthru
          _
      $region78: #{tpu_custom_call.1} parent=5 // pred_fallthru
        _
      %p1076 = scmp.le.s32.totalorder 2, %s16
      // Predicated region
      $region103: #{tpu_custom_call.1} parent=5 // pred_check
        %p1077 = pneg %p1076
      $region104: #{tpu_custom_call.1} parent=5 // pred_check_branch
        %1079 = sbr.rel (%p1077) target = $region106
      $region105: #{tpu_custom_call.1} parent=5 // pred_region
        %s1080 = ssub.s32 %s16, 2
        // Predicated region
        $region107: #{tpu_custom_call.1} parent=105 // pred_check
          %p1081 = pneg %p208
        $region108: #{tpu_custom_call.1} parent=105 // pred_check_branch
          %1083 = sbr.rel (%p1081) target = $region110
        $region109: #{tpu_custom_call.1} parent=105 // pred_region
          %s1084 = sand.u32 %s193, 1
          %s1085 = scalar_lea.sflag [#allocation4], %s1084
          %s1086 = sand.u32 %s193, 1
          %s1087 = smul.addr %s1086, 32
          %s1088 = scalar_lea.vmem [#allocation6], %s1087
          %1089 = dma.done %s1085, 512
        $region110: #{tpu_custom_call.1} parent=105 // pred_fallthru
          _
      $region106: #{tpu_custom_call.1} parent=5 // pred_fallthru
        _
    $region6: #{tpu_custom_call.1} parent=1 // loop_footer
      %s20 = sadd.s32 1, %s16
    $region7: #{tpu_custom_call.1} parent=1 // loop_footer_branch
      %15 = sbr.rel target = $region3
    $region8: #{tpu_custom_call.1} parent=1 // loop_exit
      _
    %1090 = vsyncpa [#allocation4], 1
    %s1091 = scalar_lea.sflag [#allocation4], 1
    %1092 = vsyncpa %s1091, 1
    %1093 = vsyncpa [#allocation5], 1
    %s1094 = scalar_lea.sflag [#allocation5], 1
    %1095 = vsyncpa %s1094, 1

</llo_original>
